<compile_context>
chip_gen: v6e
topology: v6e:2x2x1
jax: 0.10.0
libtpu: 0.0.40
codegen_flags: <defaults>
</compile_context>

<pallas_src>
import jax
import jax.numpy as jnp
from jax import lax
from jax.experimental import pallas as pl
from jax.experimental.pallas import tpu as pltpu

F_IN, H1, H2, F_OUT = 3, 5, 10, 3
LANES = 128
CHUNK_SUBLANES = 16                   # 2 f32 vregs (1 packed bf16 vreg) per slice
CHUNK_ROWS = CHUNK_SUBLANES * LANES   # 2048 batch rows per inner-loop iteration


def _round_up(a, b):
    return ((a + b - 1) // b) * b


def _make_mlp_kernel(chunks_per_block, total_chunks, compute_dtype):
    """Build the kernel with static per-block / total chunk counts baked in."""

    def kernel(x_ref, w1_ref, b1_ref, w2_ref, b2_ref, w3_ref, b3_ref, o_ref):
        cd = compute_dtype

        # ---- Hoist EVERY weight/bias scalar read out of the inner loop ----
        # (Mosaic does not CSE loop-invariant SMEM loads; do them once here.)
        w1 = [[w1_ref[k * H1 + j].astype(cd) for j in range(H1)] for k in range(F_IN)]
        b1 = [b1_ref[j].astype(cd) for j in range(H1)]
        w2 = [[w2_ref[k * H2 + j].astype(cd) for j in range(H2)] for k in range(H1)]
        b2 = [b2_ref[j].astype(cd) for j in range(H2)]
        w3 = [[w3_ref[k * F_OUT + j].astype(cd) for j in range(F_OUT)] for k in range(H2)]
        b3 = [b3_ref[j].astype(cd) for j in range(F_OUT)]

        # Valid chunk count for this block: the last grid step may be partial
        # because we only pad the batch to CHUNK_ROWS, not to a full tile.
        i = pl.program_id(0)
        n_chunks = jnp.minimum(chunks_per_block,
                               total_chunks - i * chunks_per_block)

        def body(c, carry):
            r0 = pl.multiple_of(c * CHUNK_SUBLANES, CHUNK_SUBLANES)
            sl = pl.ds(r0, CHUNK_SUBLANES)

            # Three input-feature planes for this chunk, each (16, 128).
            xk = [x_ref[k, sl, :].astype(cd) for k in range(F_IN)]

            # Layer 1: Linear(3 -> 5) + ReLU  (VPU broadcast-scalar FMAs)
            h1 = []
            for j in range(H1):
                acc = xk[0] * w1[0][j]
                for k in range(1, F_IN):
                    acc = acc + xk[k] * w1[k][j]
                h1.append(jnp.maximum(acc + b1[j], 0.0))

            # Layer 2: Linear(5 -> 10) + ReLU
            h2 = []
            for j in range(H2):
                acc = h1[0] * w2[0][j]
                for k in range(1, H1):
                    acc = acc + h1[k] * w2[k][j]
                h2.append(jnp.maximum(acc + b2[j], 0.0))

            # Layer 3: Linear(10 -> 3), no activation; lane-dense stores.
            for j in range(F_OUT):
                acc = h2[0] * w3[0][j]
                for k in range(1, H2):
                    acc = acc + h2[k] * w3[k][j]
                o_ref[j, sl, :] = (acc + b3[j]).astype(o_ref.dtype)

            return carry

        lax.fori_loop(0, n_chunks, body, 0)

    return kernel


def unitnet2_forward_feature_major(x_fm, params, *, tile_batch=262144,
                                   compute_dtype=jnp.float32):
    """UnitNet2 forward on a feature-major (3, N) input; returns (3, N).

    This entry point avoids all wrapper-side transpose passes (review item #3).
    """
    w1, b1, w2, b2, w3, b3 = params
    # Shape guards: weights must be stored (in, out) — i.e. the transpose of
    # PyTorch's nn.Linear (out, in) storage.
    assert w1.shape == (F_IN, H1) and b1.shape == (H1,), "layer-1 params must be (3,5)/(5,)"
    assert w2.shape == (H1, H2) and b2.shape == (H2,), "layer-2 params must be (5,10)/(10,)"
    assert w3.shape == (H2, F_OUT) and b3.shape == (F_OUT,), "layer-3 params must be (10,3)/(3,)"

    f_in, n = x_fm.shape
    assert f_in == F_IN, "UnitNet2 expects 3 input features"
    assert n > 0

    # Flatten params to 1-D f32 for SMEM residence (avoids [8,128] SMEM padding).
    flats = tuple(jnp.asarray(p, jnp.float32).reshape(-1)
                  for p in (w1, b1, w2, b2, w3, b3))

    # Pad the batch only to the 2048-row chunk granularity (not to a full tile).
    n_pad = _round_up(n, CHUNK_ROWS)

    # Tile size: multiple of CHUNK_ROWS, capped at ceil(n_pad/2) so the grid
    # has >= 2 steps whenever there is enough work (v7x dual-TensorCore).
    half = _round_up((n_pad + 1) // 2, CHUNK_ROWS)
    tb = max(CHUNK_ROWS, min(_round_up(tile_batch, CHUNK_ROWS), half))

    grid_steps = pl.cdiv(n_pad, tb)          # last block may be partial
    rb = tb // LANES                         # 128-lane rows per block
    chunks_per_block = tb // CHUNK_ROWS
    total_chunks = n_pad // CHUNK_ROWS

    if n_pad != n:
        x_fm = jnp.pad(x_fm, ((0, 0), (0, n_pad - n)))
    x_slab = x_fm.reshape(F_IN, n_pad // LANES, LANES)   # contiguous reshape

    smem = pl.BlockSpec(memory_space=pltpu.MemorySpace.SMEM)
    kernel = _make_mlp_kernel(chunks_per_block, total_chunks, compute_dtype)

    out_slab = pl.pallas_call(
        kernel,
        out_shape=jax.ShapeDtypeStruct((F_OUT, n_pad // LANES, LANES), x_fm.dtype),
        grid_spec=pltpu.PrefetchScalarGridSpec(
            num_scalar_prefetch=0,
            grid=(grid_steps,),
            in_specs=[
                pl.BlockSpec((F_IN, rb, LANES), lambda i: (0, i, 0)),  # x block
                smem, smem, smem, smem, smem, smem,                    # params
            ],
            out_specs=pl.BlockSpec((F_OUT, rb, LANES), lambda i: (0, i, 0)),
        ),
        compiler_params=pltpu.CompilerParams(
            dimension_semantics=("parallel",),
            vmem_limit_bytes=32 * 1024 * 1024),
    )(x_slab, *flats)

    return out_slab.reshape(F_OUT, n_pad)[:, :n]


def unitnet2_forward(x, params, **kwargs):
    """PyTorch-parity layout: x (N, 3) -> (N, 3).

    The (N,3) <-> (3,N) transposes here are pure API-boundary layout plumbing;
    prefer `unitnet2_forward_feature_major` to avoid them entirely.
    """
    n, f_in = x.shape
    assert f_in == F_IN, "UnitNet2 expects 3 input features"
    out_fm = unitnet2_forward_feature_major(jnp.transpose(x), params, **kwargs)
    return jnp.transpose(out_fm)


def init_params(key, input_size=3, output_size=3, dtype=jnp.float32):
    """Synthetic init matching UnitNet2's layer shapes.

    PyTorch nn.Linear stores weight as (out, in); we store the transpose
    (in, out) so the math is x @ W + b (identical to x @ W_pt.T + b_pt).
    """
    sizes = [(input_size, 5), (5, 10), (10, output_size)]
    params = []
    for fin, fout in sizes:
        kw, kb, key = jax.random.split(key, 3)
        bound = 1.0 / jnp.sqrt(fin)
        w = jax.random.uniform(kw, (fin, fout), dtype, -bound, bound)
        b = jax.random.uniform(kb, (fout,), dtype, -bound, bound)
        params += [w, b]
    return tuple(params)


def unitnet2_ref(x, params):
    w1, b1, w2, b2, w3, b3 = params
    h1 = jnp.maximum(x @ w1 + b1, 0.0)
    h2 = jnp.maximum(h1 @ w2 + b2, 0.0)
    return h2 @ w3 + b3


if __name__ == "__main__":
    key = jax.random.PRNGKey(0)
    k_x1, k_x2, k_x3, k_p = jax.random.split(key, 4)
    params = init_params(k_p, input_size=3, output_size=3)

    # 1) Tiny batch (well below one chunk) — single grid step, padded to 2048.
    x_small = jax.random.normal(k_x1, (8, F_IN), dtype=jnp.float32)
    out_small = jax.block_until_ready(unitnet2_forward(x_small, params))
    assert out_small.shape == (8, F_OUT)
    assert jnp.allclose(out_small, unitnet2_ref(x_small, params),
                        atol=1e-5, rtol=1e-5), "small-batch mismatch vs reference"

    # 2) Ragged batch exercising a multi-step grid AND a partial last block
    #    (n=5000 -> n_pad=6144, tile=4096 -> grid=(2,), last block 1 of 2 chunks valid).
    x_big = jax.random.normal(k_x2, (5000, F_IN), dtype=jnp.float32)
    ref_big = unitnet2_ref(x_big, params)
    out_big = jax.block_until_ready(
        unitnet2_forward(x_big, params, tile_batch=4096))
    assert out_big.shape == (5000, F_OUT)
    assert jnp.allclose(out_big, ref_big, atol=1e-5, rtol=1e-5), \
        "large-batch mismatch vs reference"

    # 3) Feature-major API: no wrapper transpose passes at all.
    x_fm = jax.random.normal(k_x3, (F_IN, 3000), dtype=jnp.float32)
    out_fm = jax.block_until_ready(
        unitnet2_forward_feature_major(x_fm, params, tile_batch=2048))
    assert out_fm.shape == (F_OUT, 3000)
    assert jnp.allclose(out_fm.T, unitnet2_ref(x_fm.T, params),
                        atol=1e-5, rtol=1e-5), "feature-major mismatch vs reference"

    # 4) Optional packed-bf16 compute path (review item targeting v6e/v7x VALU).
    #    Guarded: it is a target-specific fast path; if this toolchain rejects
    #    bf16 scalar splats we skip it and the f32 results above stand.
    bf16_out = None
    try:
        bf16_out = jax.block_until_ready(
            unitnet2_forward(x_big, params, tile_batch=4096,
                             compute_dtype=jnp.bfloat16))
    except Exception:
        bf16_out = None  # TODO(synk): validate packed-bf16 lowering per target.
    if bf16_out is not None:
        assert bf16_out.shape == (5000, F_OUT)
        assert jnp.allclose(bf16_out, ref_big, atol=1e-1, rtol=1e-1), \
            "bf16-compute mismatch vs f32 reference"

    print("KERNEL_OK")
</pallas_src>

<mosaic_0001>
module attributes {stable_mosaic.version = 11 : i64} {
  func.func @kernel(%arg0: i32, %arg1: memref<3x16x128xf32, #tpu.memory_space<vmem>>, %arg2: memref<15xf32, #tpu.memory_space<smem>>, %arg3: memref<5xf32, #tpu.memory_space<smem>>, %arg4: memref<50xf32, #tpu.memory_space<smem>>, %arg5: memref<10xf32, #tpu.memory_space<smem>>, %arg6: memref<30xf32, #tpu.memory_space<smem>>, %arg7: memref<3xf32, #tpu.memory_space<smem>>, %arg8: memref<3x16x128xf32, #tpu.memory_space<vmem>>) attributes {dimension_semantics = [#tpu.dimension_semantics<parallel>], iteration_bounds = array<i64: 1>, scalar_prefetch = 0 : i64, scratch_operands = 0 : i64, tpu.core_type = #tpu.core_type<tc>, window_params = [{transform_indices = @transform_0, window_bounds = array<i64: 3, 16, 128>}, {transform_indices = @transform_1, window_bounds = array<i64: 15>}, {transform_indices = @transform_2, window_bounds = array<i64: 5>}, {transform_indices = @transform_3, window_bounds = array<i64: 50>}, {transform_indices = @transform_4, window_bounds = array<i64: 10>}, {transform_indices = @transform_5, window_bounds = array<i64: 30>}, {transform_indices = @transform_6, window_bounds = array<i64: 3>}, {transform_indices = @transform_7, window_bounds = array<i64: 3, 16, 128>}]} {
    %c0 = arith.constant 0 : index
    %0 = memref.load %arg2[%c0] : memref<15xf32, #tpu.memory_space<smem>>
    %c1 = arith.constant 1 : index
    %1 = memref.load %arg2[%c1] : memref<15xf32, #tpu.memory_space<smem>>
    %c2 = arith.constant 2 : index
    %2 = memref.load %arg2[%c2] : memref<15xf32, #tpu.memory_space<smem>>
    %c3 = arith.constant 3 : index
    %3 = memref.load %arg2[%c3] : memref<15xf32, #tpu.memory_space<smem>>
    %c4 = arith.constant 4 : index
    %4 = memref.load %arg2[%c4] : memref<15xf32, #tpu.memory_space<smem>>
    %c5 = arith.constant 5 : index
    %5 = memref.load %arg2[%c5] : memref<15xf32, #tpu.memory_space<smem>>
    %c6 = arith.constant 6 : index
    %6 = memref.load %arg2[%c6] : memref<15xf32, #tpu.memory_space<smem>>
    %c7 = arith.constant 7 : index
    %7 = memref.load %arg2[%c7] : memref<15xf32, #tpu.memory_space<smem>>
    %c8 = arith.constant 8 : index
    %8 = memref.load %arg2[%c8] : memref<15xf32, #tpu.memory_space<smem>>
    %c9 = arith.constant 9 : index
    %9 = memref.load %arg2[%c9] : memref<15xf32, #tpu.memory_space<smem>>
    %c10 = arith.constant 10 : index
    %10 = memref.load %arg2[%c10] : memref<15xf32, #tpu.memory_space<smem>>
    %c11 = arith.constant 11 : index
    %11 = memref.load %arg2[%c11] : memref<15xf32, #tpu.memory_space<smem>>
    %c12 = arith.constant 12 : index
    %12 = memref.load %arg2[%c12] : memref<15xf32, #tpu.memory_space<smem>>
    %c13 = arith.constant 13 : index
    %13 = memref.load %arg2[%c13] : memref<15xf32, #tpu.memory_space<smem>>
    %c14 = arith.constant 14 : index
    %14 = memref.load %arg2[%c14] : memref<15xf32, #tpu.memory_space<smem>>
    %c0_0 = arith.constant 0 : index
    %15 = memref.load %arg3[%c0_0] : memref<5xf32, #tpu.memory_space<smem>>
    %c1_1 = arith.constant 1 : index
    %16 = memref.load %arg3[%c1_1] : memref<5xf32, #tpu.memory_space<smem>>
    %c2_2 = arith.constant 2 : index
    %17 = memref.load %arg3[%c2_2] : memref<5xf32, #tpu.memory_space<smem>>
    %c3_3 = arith.constant 3 : index
    %18 = memref.load %arg3[%c3_3] : memref<5xf32, #tpu.memory_space<smem>>
    %c4_4 = arith.constant 4 : index
    %19 = memref.load %arg3[%c4_4] : memref<5xf32, #tpu.memory_space<smem>>
    %c0_5 = arith.constant 0 : index
    %20 = memref.load %arg4[%c0_5] : memref<50xf32, #tpu.memory_space<smem>>
    %c1_6 = arith.constant 1 : index
    %21 = memref.load %arg4[%c1_6] : memref<50xf32, #tpu.memory_space<smem>>
    %c2_7 = arith.constant 2 : index
    %22 = memref.load %arg4[%c2_7] : memref<50xf32, #tpu.memory_space<smem>>
    %c3_8 = arith.constant 3 : index
    %23 = memref.load %arg4[%c3_8] : memref<50xf32, #tpu.memory_space<smem>>
    %c4_9 = arith.constant 4 : index
    %24 = memref.load %arg4[%c4_9] : memref<50xf32, #tpu.memory_space<smem>>
    %c5_10 = arith.constant 5 : index
    %25 = memref.load %arg4[%c5_10] : memref<50xf32, #tpu.memory_space<smem>>
    %c6_11 = arith.constant 6 : index
    %26 = memref.load %arg4[%c6_11] : memref<50xf32, #tpu.memory_space<smem>>
    %c7_12 = arith.constant 7 : index
    %27 = memref.load %arg4[%c7_12] : memref<50xf32, #tpu.memory_space<smem>>
    %c8_13 = arith.constant 8 : index
    %28 = memref.load %arg4[%c8_13] : memref<50xf32, #tpu.memory_space<smem>>
    %c9_14 = arith.constant 9 : index
    %29 = memref.load %arg4[%c9_14] : memref<50xf32, #tpu.memory_space<smem>>
    %c10_15 = arith.constant 10 : index
    %30 = memref.load %arg4[%c10_15] : memref<50xf32, #tpu.memory_space<smem>>
    %c11_16 = arith.constant 11 : index
    %31 = memref.load %arg4[%c11_16] : memref<50xf32, #tpu.memory_space<smem>>
    %c12_17 = arith.constant 12 : index
    %32 = memref.load %arg4[%c12_17] : memref<50xf32, #tpu.memory_space<smem>>
    %c13_18 = arith.constant 13 : index
    %33 = memref.load %arg4[%c13_18] : memref<50xf32, #tpu.memory_space<smem>>
    %c14_19 = arith.constant 14 : index
    %34 = memref.load %arg4[%c14_19] : memref<50xf32, #tpu.memory_space<smem>>
    %c15 = arith.constant 15 : index
    %35 = memref.load %arg4[%c15] : memref<50xf32, #tpu.memory_space<smem>>
    %c16 = arith.constant 16 : index
    %36 = memref.load %arg4[%c16] : memref<50xf32, #tpu.memory_space<smem>>
    %c17 = arith.constant 17 : index
    %37 = memref.load %arg4[%c17] : memref<50xf32, #tpu.memory_space<smem>>
    %c18 = arith.constant 18 : index
    %38 = memref.load %arg4[%c18] : memref<50xf32, #tpu.memory_space<smem>>
    %c19 = arith.constant 19 : index
    %39 = memref.load %arg4[%c19] : memref<50xf32, #tpu.memory_space<smem>>
    %c20 = arith.constant 20 : index
    %40 = memref.load %arg4[%c20] : memref<50xf32, #tpu.memory_space<smem>>
    %c21 = arith.constant 21 : index
    %41 = memref.load %arg4[%c21] : memref<50xf32, #tpu.memory_space<smem>>
    %c22 = arith.constant 22 : index
    %42 = memref.load %arg4[%c22] : memref<50xf32, #tpu.memory_space<smem>>
    %c23 = arith.constant 23 : index
    %43 = memref.load %arg4[%c23] : memref<50xf32, #tpu.memory_space<smem>>
    %c24 = arith.constant 24 : index
    %44 = memref.load %arg4[%c24] : memref<50xf32, #tpu.memory_space<smem>>
    %c25 = arith.constant 25 : index
    %45 = memref.load %arg4[%c25] : memref<50xf32, #tpu.memory_space<smem>>
    %c26 = arith.constant 26 : index
    %46 = memref.load %arg4[%c26] : memref<50xf32, #tpu.memory_space<smem>>
    %c27 = arith.constant 27 : index
    %47 = memref.load %arg4[%c27] : memref<50xf32, #tpu.memory_space<smem>>
    %c28 = arith.constant 28 : index
    %48 = memref.load %arg4[%c28] : memref<50xf32, #tpu.memory_space<smem>>
    %c29 = arith.constant 29 : index
    %49 = memref.load %arg4[%c29] : memref<50xf32, #tpu.memory_space<smem>>
    %c30 = arith.constant 30 : index
    %50 = memref.load %arg4[%c30] : memref<50xf32, #tpu.memory_space<smem>>
    %c31 = arith.constant 31 : index
    %51 = memref.load %arg4[%c31] : memref<50xf32, #tpu.memory_space<smem>>
    %c32 = arith.constant 32 : index
    %52 = memref.load %arg4[%c32] : memref<50xf32, #tpu.memory_space<smem>>
    %c33 = arith.constant 33 : index
    %53 = memref.load %arg4[%c33] : memref<50xf32, #tpu.memory_space<smem>>
    %c34 = arith.constant 34 : index
    %54 = memref.load %arg4[%c34] : memref<50xf32, #tpu.memory_space<smem>>
    %c35 = arith.constant 35 : index
    %55 = memref.load %arg4[%c35] : memref<50xf32, #tpu.memory_space<smem>>
    %c36 = arith.constant 36 : index
    %56 = memref.load %arg4[%c36] : memref<50xf32, #tpu.memory_space<smem>>
    %c37 = arith.constant 37 : index
    %57 = memref.load %arg4[%c37] : memref<50xf32, #tpu.memory_space<smem>>
    %c38 = arith.constant 38 : index
    %58 = memref.load %arg4[%c38] : memref<50xf32, #tpu.memory_space<smem>>
    %c39 = arith.constant 39 : index
    %59 = memref.load %arg4[%c39] : memref<50xf32, #tpu.memory_space<smem>>
    %c40 = arith.constant 40 : index
    %60 = memref.load %arg4[%c40] : memref<50xf32, #tpu.memory_space<smem>>
    %c41 = arith.constant 41 : index
    %61 = memref.load %arg4[%c41] : memref<50xf32, #tpu.memory_space<smem>>
    %c42 = arith.constant 42 : index
    %62 = memref.load %arg4[%c42] : memref<50xf32, #tpu.memory_space<smem>>
    %c43 = arith.constant 43 : index
    %63 = memref.load %arg4[%c43] : memref<50xf32, #tpu.memory_space<smem>>
    %c44 = arith.constant 44 : index
    %64 = memref.load %arg4[%c44] : memref<50xf32, #tpu.memory_space<smem>>
    %c45 = arith.constant 45 : index
    %65 = memref.load %arg4[%c45] : memref<50xf32, #tpu.memory_space<smem>>
    %c46 = arith.constant 46 : index
    %66 = memref.load %arg4[%c46] : memref<50xf32, #tpu.memory_space<smem>>
    %c47 = arith.constant 47 : index
    %67 = memref.load %arg4[%c47] : memref<50xf32, #tpu.memory_space<smem>>
    %c48 = arith.constant 48 : index
    %68 = memref.load %arg4[%c48] : memref<50xf32, #tpu.memory_space<smem>>
    %c49 = arith.constant 49 : index
    %69 = memref.load %arg4[%c49] : memref<50xf32, #tpu.memory_space<smem>>
    %c0_20 = arith.constant 0 : index
    %70 = memref.load %arg5[%c0_20] : memref<10xf32, #tpu.memory_space<smem>>
    %c1_21 = arith.constant 1 : index
    %71 = memref.load %arg5[%c1_21] : memref<10xf32, #tpu.memory_space<smem>>
    %c2_22 = arith.constant 2 : index
    %72 = memref.load %arg5[%c2_22] : memref<10xf32, #tpu.memory_space<smem>>
    %c3_23 = arith.constant 3 : index
    %73 = memref.load %arg5[%c3_23] : memref<10xf32, #tpu.memory_space<smem>>
    %c4_24 = arith.constant 4 : index
    %74 = memref.load %arg5[%c4_24] : memref<10xf32, #tpu.memory_space<smem>>
    %c5_25 = arith.constant 5 : index
    %75 = memref.load %arg5[%c5_25] : memref<10xf32, #tpu.memory_space<smem>>
    %c6_26 = arith.constant 6 : index
    %76 = memref.load %arg5[%c6_26] : memref<10xf32, #tpu.memory_space<smem>>
    %c7_27 = arith.constant 7 : index
    %77 = memref.load %arg5[%c7_27] : memref<10xf32, #tpu.memory_space<smem>>
    %c8_28 = arith.constant 8 : index
    %78 = memref.load %arg5[%c8_28] : memref<10xf32, #tpu.memory_space<smem>>
    %c9_29 = arith.constant 9 : index
    %79 = memref.load %arg5[%c9_29] : memref<10xf32, #tpu.memory_space<smem>>
    %c0_30 = arith.constant 0 : index
    %80 = memref.load %arg6[%c0_30] : memref<30xf32, #tpu.memory_space<smem>>
    %c1_31 = arith.constant 1 : index
    %81 = memref.load %arg6[%c1_31] : memref<30xf32, #tpu.memory_space<smem>>
    %c2_32 = arith.constant 2 : index
    %82 = memref.load %arg6[%c2_32] : memref<30xf32, #tpu.memory_space<smem>>
    %c3_33 = arith.constant 3 : index
    %83 = memref.load %arg6[%c3_33] : memref<30xf32, #tpu.memory_space<smem>>
    %c4_34 = arith.constant 4 : index
    %84 = memref.load %arg6[%c4_34] : memref<30xf32, #tpu.memory_space<smem>>
    %c5_35 = arith.constant 5 : index
    %85 = memref.load %arg6[%c5_35] : memref<30xf32, #tpu.memory_space<smem>>
    %c6_36 = arith.constant 6 : index
    %86 = memref.load %arg6[%c6_36] : memref<30xf32, #tpu.memory_space<smem>>
    %c7_37 = arith.constant 7 : index
    %87 = memref.load %arg6[%c7_37] : memref<30xf32, #tpu.memory_space<smem>>
    %c8_38 = arith.constant 8 : index
    %88 = memref.load %arg6[%c8_38] : memref<30xf32, #tpu.memory_space<smem>>
    %c9_39 = arith.constant 9 : index
    %89 = memref.load %arg6[%c9_39] : memref<30xf32, #tpu.memory_space<smem>>
    %c10_40 = arith.constant 10 : index
    %90 = memref.load %arg6[%c10_40] : memref<30xf32, #tpu.memory_space<smem>>
    %c11_41 = arith.constant 11 : index
    %91 = memref.load %arg6[%c11_41] : memref<30xf32, #tpu.memory_space<smem>>
    %c12_42 = arith.constant 12 : index
    %92 = memref.load %arg6[%c12_42] : memref<30xf32, #tpu.memory_space<smem>>
    %c13_43 = arith.constant 13 : index
    %93 = memref.load %arg6[%c13_43] : memref<30xf32, #tpu.memory_space<smem>>
    %c14_44 = arith.constant 14 : index
    %94 = memref.load %arg6[%c14_44] : memref<30xf32, #tpu.memory_space<smem>>
    %c15_45 = arith.constant 15 : index
    %95 = memref.load %arg6[%c15_45] : memref<30xf32, #tpu.memory_space<smem>>
    %c16_46 = arith.constant 16 : index
    %96 = memref.load %arg6[%c16_46] : memref<30xf32, #tpu.memory_space<smem>>
    %c17_47 = arith.constant 17 : index
    %97 = memref.load %arg6[%c17_47] : memref<30xf32, #tpu.memory_space<smem>>
    %c18_48 = arith.constant 18 : index
    %98 = memref.load %arg6[%c18_48] : memref<30xf32, #tpu.memory_space<smem>>
    %c19_49 = arith.constant 19 : index
    %99 = memref.load %arg6[%c19_49] : memref<30xf32, #tpu.memory_space<smem>>
    %c20_50 = arith.constant 20 : index
    %100 = memref.load %arg6[%c20_50] : memref<30xf32, #tpu.memory_space<smem>>
    %c21_51 = arith.constant 21 : index
    %101 = memref.load %arg6[%c21_51] : memref<30xf32, #tpu.memory_space<smem>>
    %c22_52 = arith.constant 22 : index
    %102 = memref.load %arg6[%c22_52] : memref<30xf32, #tpu.memory_space<smem>>
    %c23_53 = arith.constant 23 : index
    %103 = memref.load %arg6[%c23_53] : memref<30xf32, #tpu.memory_space<smem>>
    %c24_54 = arith.constant 24 : index
    %104 = memref.load %arg6[%c24_54] : memref<30xf32, #tpu.memory_space<smem>>
    %c25_55 = arith.constant 25 : index
    %105 = memref.load %arg6[%c25_55] : memref<30xf32, #tpu.memory_space<smem>>
    %c26_56 = arith.constant 26 : index
    %106 = memref.load %arg6[%c26_56] : memref<30xf32, #tpu.memory_space<smem>>
    %c27_57 = arith.constant 27 : index
    %107 = memref.load %arg6[%c27_57] : memref<30xf32, #tpu.memory_space<smem>>
    %c28_58 = arith.constant 28 : index
    %108 = memref.load %arg6[%c28_58] : memref<30xf32, #tpu.memory_space<smem>>
    %c29_59 = arith.constant 29 : index
    %109 = memref.load %arg6[%c29_59] : memref<30xf32, #tpu.memory_space<smem>>
    %c0_60 = arith.constant 0 : index
    %110 = memref.load %arg7[%c0_60] : memref<3xf32, #tpu.memory_space<smem>>
    %c1_61 = arith.constant 1 : index
    %111 = memref.load %arg7[%c1_61] : memref<3xf32, #tpu.memory_space<smem>>
    %c2_62 = arith.constant 2 : index
    %112 = memref.load %arg7[%c2_62] : memref<3xf32, #tpu.memory_space<smem>>
    %c1_i32 = arith.constant 1 : i32
    %113 = arith.muli %arg0, %c1_i32 : i32
    %c1_i32_63 = arith.constant 1 : i32
    %114 = arith.subi %c1_i32_63, %113 : i32
    %c1_i32_64 = arith.constant 1 : i32
    %115 = arith.minsi %c1_i32_64, %114 : i32
    %c0_i32 = arith.constant 0 : i32
    %c0_i32_65 = arith.constant 0 : i32
    %116 = arith.subi %115, %c0_i32_65 : i32
    %117 = arith.addi %c0_i32_65, %116 : i32
    %c1_i32_66 = arith.constant 1 : i32
    scf.for %arg9 = %c0_i32_65 to %117 step %c1_i32_66  : i32 {
      %c16_i32 = arith.constant 16 : i32
      %118 = arith.muli %arg9, %c16_i32 : i32
      %119 = tpu.assume_multiple %118, 16 : i32
      %c0_67 = arith.constant 0 : index
      %120 = arith.index_cast %119 : i32 to index
      %c0_68 = arith.constant 0 : index
      %121 = vector.load %arg1[%c0_67, %120, %c0_68] : memref<3x16x128xf32, #tpu.memory_space<vmem>>, vector<1x16x128xf32>
      %122 = vector.shape_cast %121 : vector<1x16x128xf32> to vector<16x128xf32>
      %c1_69 = arith.constant 1 : index
      %123 = arith.index_cast %119 : i32 to index
      %c0_70 = arith.constant 0 : index
      %124 = vector.load %arg1[%c1_69, %123, %c0_70] : memref<3x16x128xf32, #tpu.memory_space<vmem>>, vector<1x16x128xf32>
      %125 = vector.shape_cast %124 : vector<1x16x128xf32> to vector<16x128xf32>
      %c2_71 = arith.constant 2 : index
      %126 = arith.index_cast %119 : i32 to index
      %c0_72 = arith.constant 0 : index
      %127 = vector.load %arg1[%c2_71, %126, %c0_72] : memref<3x16x128xf32, #tpu.memory_space<vmem>>, vector<1x16x128xf32>
      %128 = vector.shape_cast %127 : vector<1x16x128xf32> to vector<16x128xf32>
      %129 = vector.broadcast %0 : f32 to vector<16x128xf32>
      %130 = arith.mulf %122, %129 : vector<16x128xf32>
      %131 = vector.broadcast %5 : f32 to vector<16x128xf32>
      %132 = arith.mulf %125, %131 : vector<16x128xf32>
      %133 = arith.addf %130, %132 : vector<16x128xf32>
      %134 = vector.broadcast %10 : f32 to vector<16x128xf32>
      %135 = arith.mulf %128, %134 : vector<16x128xf32>
      %136 = arith.addf %133, %135 : vector<16x128xf32>
      %137 = vector.broadcast %15 : f32 to vector<16x128xf32>
      %138 = arith.addf %136, %137 : vector<16x128xf32>
      %cst = arith.constant 0.000000e+00 : f32
      %139 = vector.broadcast %cst : f32 to vector<16x128xf32>
      %140 = arith.maximumf %138, %139 : vector<16x128xf32>
      %141 = vector.broadcast %1 : f32 to vector<16x128xf32>
      %142 = arith.mulf %122, %141 : vector<16x128xf32>
      %143 = vector.broadcast %6 : f32 to vector<16x128xf32>
      %144 = arith.mulf %125, %143 : vector<16x128xf32>
      %145 = arith.addf %142, %144 : vector<16x128xf32>
      %146 = vector.broadcast %11 : f32 to vector<16x128xf32>
      %147 = arith.mulf %128, %146 : vector<16x128xf32>
      %148 = arith.addf %145, %147 : vector<16x128xf32>
      %149 = vector.broadcast %16 : f32 to vector<16x128xf32>
      %150 = arith.addf %148, %149 : vector<16x128xf32>
      %cst_73 = arith.constant 0.000000e+00 : f32
      %151 = vector.broadcast %cst_73 : f32 to vector<16x128xf32>
      %152 = arith.maximumf %150, %151 : vector<16x128xf32>
      %153 = vector.broadcast %2 : f32 to vector<16x128xf32>
      %154 = arith.mulf %122, %153 : vector<16x128xf32>
      %155 = vector.broadcast %7 : f32 to vector<16x128xf32>
      %156 = arith.mulf %125, %155 : vector<16x128xf32>
      %157 = arith.addf %154, %156 : vector<16x128xf32>
      %158 = vector.broadcast %12 : f32 to vector<16x128xf32>
      %159 = arith.mulf %128, %158 : vector<16x128xf32>
      %160 = arith.addf %157, %159 : vector<16x128xf32>
      %161 = vector.broadcast %17 : f32 to vector<16x128xf32>
      %162 = arith.addf %160, %161 : vector<16x128xf32>
      %cst_74 = arith.constant 0.000000e+00 : f32
      %163 = vector.broadcast %cst_74 : f32 to vector<16x128xf32>
      %164 = arith.maximumf %162, %163 : vector<16x128xf32>
      %165 = vector.broadcast %3 : f32 to vector<16x128xf32>
      %166 = arith.mulf %122, %165 : vector<16x128xf32>
      %167 = vector.broadcast %8 : f32 to vector<16x128xf32>
      %168 = arith.mulf %125, %167 : vector<16x128xf32>
      %169 = arith.addf %166, %168 : vector<16x128xf32>
      %170 = vector.broadcast %13 : f32 to vector<16x128xf32>
      %171 = arith.mulf %128, %170 : vector<16x128xf32>
      %172 = arith.addf %169, %171 : vector<16x128xf32>
      %173 = vector.broadcast %18 : f32 to vector<16x128xf32>
      %174 = arith.addf %172, %173 : vector<16x128xf32>
      %cst_75 = arith.constant 0.000000e+00 : f32
      %175 = vector.broadcast %cst_75 : f32 to vector<16x128xf32>
      %176 = arith.maximumf %174, %175 : vector<16x128xf32>
      %177 = vector.broadcast %4 : f32 to vector<16x128xf32>
      %178 = arith.mulf %122, %177 : vector<16x128xf32>
      %179 = vector.broadcast %9 : f32 to vector<16x128xf32>
      %180 = arith.mulf %125, %179 : vector<16x128xf32>
      %181 = arith.addf %178, %180 : vector<16x128xf32>
      %182 = vector.broadcast %14 : f32 to vector<16x128xf32>
      %183 = arith.mulf %128, %182 : vector<16x128xf32>
      %184 = arith.addf %181, %183 : vector<16x128xf32>
      %185 = vector.broadcast %19 : f32 to vector<16x128xf32>
      %186 = arith.addf %184, %185 : vector<16x128xf32>
      %cst_76 = arith.constant 0.000000e+00 : f32
      %187 = vector.broadcast %cst_76 : f32 to vector<16x128xf32>
      %188 = arith.maximumf %186, %187 : vector<16x128xf32>
      %189 = vector.broadcast %20 : f32 to vector<16x128xf32>
      %190 = arith.mulf %140, %189 : vector<16x128xf32>
      %191 = vector.broadcast %30 : f32 to vector<16x128xf32>
      %192 = arith.mulf %152, %191 : vector<16x128xf32>
      %193 = arith.addf %190, %192 : vector<16x128xf32>
      %194 = vector.broadcast %40 : f32 to vector<16x128xf32>
      %195 = arith.mulf %164, %194 : vector<16x128xf32>
      %196 = arith.addf %193, %195 : vector<16x128xf32>
      %197 = vector.broadcast %50 : f32 to vector<16x128xf32>
      %198 = arith.mulf %176, %197 : vector<16x128xf32>
      %199 = arith.addf %196, %198 : vector<16x128xf32>
      %200 = vector.broadcast %60 : f32 to vector<16x128xf32>
      %201 = arith.mulf %188, %200 : vector<16x128xf32>
      %202 = arith.addf %199, %201 : vector<16x128xf32>
      %203 = vector.broadcast %70 : f32 to vector<16x128xf32>
      %204 = arith.addf %202, %203 : vector<16x128xf32>
      %cst_77 = arith.constant 0.000000e+00 : f32
      %205 = vector.broadcast %cst_77 : f32 to vector<16x128xf32>
      %206 = arith.maximumf %204, %205 : vector<16x128xf32>
      %207 = vector.broadcast %21 : f32 to vector<16x128xf32>
      %208 = arith.mulf %140, %207 : vector<16x128xf32>
      %209 = vector.broadcast %31 : f32 to vector<16x128xf32>
      %210 = arith.mulf %152, %209 : vector<16x128xf32>
      %211 = arith.addf %208, %210 : vector<16x128xf32>
      %212 = vector.broadcast %41 : f32 to vector<16x128xf32>
      %213 = arith.mulf %164, %212 : vector<16x128xf32>
      %214 = arith.addf %211, %213 : vector<16x128xf32>
      %215 = vector.broadcast %51 : f32 to vector<16x128xf32>
      %216 = arith.mulf %176, %215 : vector<16x128xf32>
      %217 = arith.addf %214, %216 : vector<16x128xf32>
      %218 = vector.broadcast %61 : f32 to vector<16x128xf32>
      %219 = arith.mulf %188, %218 : vector<16x128xf32>
      %220 = arith.addf %217, %219 : vector<16x128xf32>
      %221 = vector.broadcast %71 : f32 to vector<16x128xf32>
      %222 = arith.addf %220, %221 : vector<16x128xf32>
      %cst_78 = arith.constant 0.000000e+00 : f32
      %223 = vector.broadcast %cst_78 : f32 to vector<16x128xf32>
      %224 = arith.maximumf %222, %223 : vector<16x128xf32>
      %225 = vector.broadcast %22 : f32 to vector<16x128xf32>
      %226 = arith.mulf %140, %225 : vector<16x128xf32>
      %227 = vector.broadcast %32 : f32 to vector<16x128xf32>
      %228 = arith.mulf %152, %227 : vector<16x128xf32>
      %229 = arith.addf %226, %228 : vector<16x128xf32>
      %230 = vector.broadcast %42 : f32 to vector<16x128xf32>
      %231 = arith.mulf %164, %230 : vector<16x128xf32>
      %232 = arith.addf %229, %231 : vector<16x128xf32>
      %233 = vector.broadcast %52 : f32 to vector<16x128xf32>
      %234 = arith.mulf %176, %233 : vector<16x128xf32>
      %235 = arith.addf %232, %234 : vector<16x128xf32>
      %236 = vector.broadcast %62 : f32 to vector<16x128xf32>
      %237 = arith.mulf %188, %236 : vector<16x128xf32>
      %238 = arith.addf %235, %237 : vector<16x128xf32>
      %239 = vector.broadcast %72 : f32 to vector<16x128xf32>
      %240 = arith.addf %238, %239 : vector<16x128xf32>
      %cst_79 = arith.constant 0.000000e+00 : f32
      %241 = vector.broadcast %cst_79 : f32 to vector<16x128xf32>
      %242 = arith.maximumf %240, %241 : vector<16x128xf32>
      %243 = vector.broadcast %23 : f32 to vector<16x128xf32>
      %244 = arith.mulf %140, %243 : vector<16x128xf32>
      %245 = vector.broadcast %33 : f32 to vector<16x128xf32>
      %246 = arith.mulf %152, %245 : vector<16x128xf32>
      %247 = arith.addf %244, %246 : vector<16x128xf32>
      %248 = vector.broadcast %43 : f32 to vector<16x128xf32>
      %249 = arith.mulf %164, %248 : vector<16x128xf32>
      %250 = arith.addf %247, %249 : vector<16x128xf32>
      %251 = vector.broadcast %53 : f32 to vector<16x128xf32>
      %252 = arith.mulf %176, %251 : vector<16x128xf32>
      %253 = arith.addf %250, %252 : vector<16x128xf32>
      %254 = vector.broadcast %63 : f32 to vector<16x128xf32>
      %255 = arith.mulf %188, %254 : vector<16x128xf32>
      %256 = arith.addf %253, %255 : vector<16x128xf32>
      %257 = vector.broadcast %73 : f32 to vector<16x128xf32>
      %258 = arith.addf %256, %257 : vector<16x128xf32>
      %cst_80 = arith.constant 0.000000e+00 : f32
      %259 = vector.broadcast %cst_80 : f32 to vector<16x128xf32>
      %260 = arith.maximumf %258, %259 : vector<16x128xf32>
      %261 = vector.broadcast %24 : f32 to vector<16x128xf32>
      %262 = arith.mulf %140, %261 : vector<16x128xf32>
      %263 = vector.broadcast %34 : f32 to vector<16x128xf32>
      %264 = arith.mulf %152, %263 : vector<16x128xf32>
      %265 = arith.addf %262, %264 : vector<16x128xf32>
      %266 = vector.broadcast %44 : f32 to vector<16x128xf32>
      %267 = arith.mulf %164, %266 : vector<16x128xf32>
      %268 = arith.addf %265, %267 : vector<16x128xf32>
      %269 = vector.broadcast %54 : f32 to vector<16x128xf32>
      %270 = arith.mulf %176, %269 : vector<16x128xf32>
      %271 = arith.addf %268, %270 : vector<16x128xf32>
      %272 = vector.broadcast %64 : f32 to vector<16x128xf32>
      %273 = arith.mulf %188, %272 : vector<16x128xf32>
      %274 = arith.addf %271, %273 : vector<16x128xf32>
      %275 = vector.broadcast %74 : f32 to vector<16x128xf32>
      %276 = arith.addf %274, %275 : vector<16x128xf32>
      %cst_81 = arith.constant 0.000000e+00 : f32
      %277 = vector.broadcast %cst_81 : f32 to vector<16x128xf32>
      %278 = arith.maximumf %276, %277 : vector<16x128xf32>
      %279 = vector.broadcast %25 : f32 to vector<16x128xf32>
      %280 = arith.mulf %140, %279 : vector<16x128xf32>
      %281 = vector.broadcast %35 : f32 to vector<16x128xf32>
      %282 = arith.mulf %152, %281 : vector<16x128xf32>
      %283 = arith.addf %280, %282 : vector<16x128xf32>
      %284 = vector.broadcast %45 : f32 to vector<16x128xf32>
      %285 = arith.mulf %164, %284 : vector<16x128xf32>
      %286 = arith.addf %283, %285 : vector<16x128xf32>
      %287 = vector.broadcast %55 : f32 to vector<16x128xf32>
      %288 = arith.mulf %176, %287 : vector<16x128xf32>
      %289 = arith.addf %286, %288 : vector<16x128xf32>
      %290 = vector.broadcast %65 : f32 to vector<16x128xf32>
      %291 = arith.mulf %188, %290 : vector<16x128xf32>
      %292 = arith.addf %289, %291 : vector<16x128xf32>
      %293 = vector.broadcast %75 : f32 to vector<16x128xf32>
      %294 = arith.addf %292, %293 : vector<16x128xf32>
      %cst_82 = arith.constant 0.000000e+00 : f32
      %295 = vector.broadcast %cst_82 : f32 to vector<16x128xf32>
      %296 = arith.maximumf %294, %295 : vector<16x128xf32>
      %297 = vector.broadcast %26 : f32 to vector<16x128xf32>
      %298 = arith.mulf %140, %297 : vector<16x128xf32>
      %299 = vector.broadcast %36 : f32 to vector<16x128xf32>
      %300 = arith.mulf %152, %299 : vector<16x128xf32>
      %301 = arith.addf %298, %300 : vector<16x128xf32>
      %302 = vector.broadcast %46 : f32 to vector<16x128xf32>
      %303 = arith.mulf %164, %302 : vector<16x128xf32>
      %304 = arith.addf %301, %303 : vector<16x128xf32>
      %305 = vector.broadcast %56 : f32 to vector<16x128xf32>
      %306 = arith.mulf %176, %305 : vector<16x128xf32>
      %307 = arith.addf %304, %306 : vector<16x128xf32>
      %308 = vector.broadcast %66 : f32 to vector<16x128xf32>
      %309 = arith.mulf %188, %308 : vector<16x128xf32>
      %310 = arith.addf %307, %309 : vector<16x128xf32>
      %311 = vector.broadcast %76 : f32 to vector<16x128xf32>
      %312 = arith.addf %310, %311 : vector<16x128xf32>
      %cst_83 = arith.constant 0.000000e+00 : f32
      %313 = vector.broadcast %cst_83 : f32 to vector<16x128xf32>
      %314 = arith.maximumf %312, %313 : vector<16x128xf32>
      %315 = vector.broadcast %27 : f32 to vector<16x128xf32>
      %316 = arith.mulf %140, %315 : vector<16x128xf32>
      %317 = vector.broadcast %37 : f32 to vector<16x128xf32>
      %318 = arith.mulf %152, %317 : vector<16x128xf32>
      %319 = arith.addf %316, %318 : vector<16x128xf32>
      %320 = vector.broadcast %47 : f32 to vector<16x128xf32>
      %321 = arith.mulf %164, %320 : vector<16x128xf32>
      %322 = arith.addf %319, %321 : vector<16x128xf32>
      %323 = vector.broadcast %57 : f32 to vector<16x128xf32>
      %324 = arith.mulf %176, %323 : vector<16x128xf32>
      %325 = arith.addf %322, %324 : vector<16x128xf32>
      %326 = vector.broadcast %67 : f32 to vector<16x128xf32>
      %327 = arith.mulf %188, %326 : vector<16x128xf32>
      %328 = arith.addf %325, %327 : vector<16x128xf32>
      %329 = vector.broadcast %77 : f32 to vector<16x128xf32>
      %330 = arith.addf %328, %329 : vector<16x128xf32>
      %cst_84 = arith.constant 0.000000e+00 : f32
      %331 = vector.broadcast %cst_84 : f32 to vector<16x128xf32>
      %332 = arith.maximumf %330, %331 : vector<16x128xf32>
      %333 = vector.broadcast %28 : f32 to vector<16x128xf32>
      %334 = arith.mulf %140, %333 : vector<16x128xf32>
      %335 = vector.broadcast %38 : f32 to vector<16x128xf32>
      %336 = arith.mulf %152, %335 : vector<16x128xf32>
      %337 = arith.addf %334, %336 : vector<16x128xf32>
      %338 = vector.broadcast %48 : f32 to vector<16x128xf32>
      %339 = arith.mulf %164, %338 : vector<16x128xf32>
      %340 = arith.addf %337, %339 : vector<16x128xf32>
      %341 = vector.broadcast %58 : f32 to vector<16x128xf32>
      %342 = arith.mulf %176, %341 : vector<16x128xf32>
      %343 = arith.addf %340, %342 : vector<16x128xf32>
      %344 = vector.broadcast %68 : f32 to vector<16x128xf32>
      %345 = arith.mulf %188, %344 : vector<16x128xf32>
      %346 = arith.addf %343, %345 : vector<16x128xf32>
      %347 = vector.broadcast %78 : f32 to vector<16x128xf32>
      %348 = arith.addf %346, %347 : vector<16x128xf32>
      %cst_85 = arith.constant 0.000000e+00 : f32
      %349 = vector.broadcast %cst_85 : f32 to vector<16x128xf32>
      %350 = arith.maximumf %348, %349 : vector<16x128xf32>
      %351 = vector.broadcast %29 : f32 to vector<16x128xf32>
      %352 = arith.mulf %140, %351 : vector<16x128xf32>
      %353 = vector.broadcast %39 : f32 to vector<16x128xf32>
      %354 = arith.mulf %152, %353 : vector<16x128xf32>
      %355 = arith.addf %352, %354 : vector<16x128xf32>
      %356 = vector.broadcast %49 : f32 to vector<16x128xf32>
      %357 = arith.mulf %164, %356 : vector<16x128xf32>
      %358 = arith.addf %355, %357 : vector<16x128xf32>
      %359 = vector.broadcast %59 : f32 to vector<16x128xf32>
      %360 = arith.mulf %176, %359 : vector<16x128xf32>
      %361 = arith.addf %358, %360 : vector<16x128xf32>
      %362 = vector.broadcast %69 : f32 to vector<16x128xf32>
      %363 = arith.mulf %188, %362 : vector<16x128xf32>
      %364 = arith.addf %361, %363 : vector<16x128xf32>
      %365 = vector.broadcast %79 : f32 to vector<16x128xf32>
      %366 = arith.addf %364, %365 : vector<16x128xf32>
      %cst_86 = arith.constant 0.000000e+00 : f32
      %367 = vector.broadcast %cst_86 : f32 to vector<16x128xf32>
      %368 = arith.maximumf %366, %367 : vector<16x128xf32>
      %369 = vector.broadcast %80 : f32 to vector<16x128xf32>
      %370 = arith.mulf %206, %369 : vector<16x128xf32>
      %371 = vector.broadcast %83 : f32 to vector<16x128xf32>
      %372 = arith.mulf %224, %371 : vector<16x128xf32>
      %373 = arith.addf %370, %372 : vector<16x128xf32>
      %374 = vector.broadcast %86 : f32 to vector<16x128xf32>
      %375 = arith.mulf %242, %374 : vector<16x128xf32>
      %376 = arith.addf %373, %375 : vector<16x128xf32>
      %377 = vector.broadcast %89 : f32 to vector<16x128xf32>
      %378 = arith.mulf %260, %377 : vector<16x128xf32>
      %379 = arith.addf %376, %378 : vector<16x128xf32>
      %380 = vector.broadcast %92 : f32 to vector<16x128xf32>
      %381 = arith.mulf %278, %380 : vector<16x128xf32>
      %382 = arith.addf %379, %381 : vector<16x128xf32>
      %383 = vector.broadcast %95 : f32 to vector<16x128xf32>
      %384 = arith.mulf %296, %383 : vector<16x128xf32>
      %385 = arith.addf %382, %384 : vector<16x128xf32>
      %386 = vector.broadcast %98 : f32 to vector<16x128xf32>
      %387 = arith.mulf %314, %386 : vector<16x128xf32>
      %388 = arith.addf %385, %387 : vector<16x128xf32>
      %389 = vector.broadcast %101 : f32 to vector<16x128xf32>
      %390 = arith.mulf %332, %389 : vector<16x128xf32>
      %391 = arith.addf %388, %390 : vector<16x128xf32>
      %392 = vector.broadcast %104 : f32 to vector<16x128xf32>
      %393 = arith.mulf %350, %392 : vector<16x128xf32>
      %394 = arith.addf %391, %393 : vector<16x128xf32>
      %395 = vector.broadcast %107 : f32 to vector<16x128xf32>
      %396 = arith.mulf %368, %395 : vector<16x128xf32>
      %397 = arith.addf %394, %396 : vector<16x128xf32>
      %398 = vector.broadcast %110 : f32 to vector<16x128xf32>
      %399 = arith.addf %397, %398 : vector<16x128xf32>
      %c0_87 = arith.constant 0 : index
      %400 = arith.index_cast %119 : i32 to index
      %c0_88 = arith.constant 0 : index
      %401 = vector.load %arg8[%c0_87, %400, %c0_88] : memref<3x16x128xf32, #tpu.memory_space<vmem>>, vector<1x16x128xf32>
      %402 = vector.shape_cast %401 : vector<1x16x128xf32> to vector<16x128xf32>
      %403 = vector.shape_cast %399 : vector<16x128xf32> to vector<1x16x128xf32>
      tpu.vector_store %arg8[%c0_87, %400, %c0_88], %403 {strides = array<i32>} : memref<3x16x128xf32, #tpu.memory_space<vmem>>, vector<1x16x128xf32>,
      %404 = vector.broadcast %81 : f32 to vector<16x128xf32>
      %405 = arith.mulf %206, %404 : vector<16x128xf32>
      %406 = vector.broadcast %84 : f32 to vector<16x128xf32>
      %407 = arith.mulf %224, %406 : vector<16x128xf32>
      %408 = arith.addf %405, %407 : vector<16x128xf32>
      %409 = vector.broadcast %87 : f32 to vector<16x128xf32>
      %410 = arith.mulf %242, %409 : vector<16x128xf32>
      %411 = arith.addf %408, %410 : vector<16x128xf32>
      %412 = vector.broadcast %90 : f32 to vector<16x128xf32>
      %413 = arith.mulf %260, %412 : vector<16x128xf32>
      %414 = arith.addf %411, %413 : vector<16x128xf32>
      %415 = vector.broadcast %93 : f32 to vector<16x128xf32>
      %416 = arith.mulf %278, %415 : vector<16x128xf32>
      %417 = arith.addf %414, %416 : vector<16x128xf32>
      %418 = vector.broadcast %96 : f32 to vector<16x128xf32>
      %419 = arith.mulf %296, %418 : vector<16x128xf32>
      %420 = arith.addf %417, %419 : vector<16x128xf32>
      %421 = vector.broadcast %99 : f32 to vector<16x128xf32>
      %422 = arith.mulf %314, %421 : vector<16x128xf32>
      %423 = arith.addf %420, %422 : vector<16x128xf32>
      %424 = vector.broadcast %102 : f32 to vector<16x128xf32>
      %425 = arith.mulf %332, %424 : vector<16x128xf32>
      %426 = arith.addf %423, %425 : vector<16x128xf32>
      %427 = vector.broadcast %105 : f32 to vector<16x128xf32>
      %428 = arith.mulf %350, %427 : vector<16x128xf32>
      %429 = arith.addf %426, %428 : vector<16x128xf32>
      %430 = vector.broadcast %108 : f32 to vector<16x128xf32>
      %431 = arith.mulf %368, %430 : vector<16x128xf32>
      %432 = arith.addf %429, %431 : vector<16x128xf32>
      %433 = vector.broadcast %111 : f32 to vector<16x128xf32>
      %434 = arith.addf %432, %433 : vector<16x128xf32>
      %c1_89 = arith.constant 1 : index
      %435 = arith.index_cast %119 : i32 to index
      %c0_90 = arith.constant 0 : index
      %436 = vector.load %arg8[%c1_89, %435, %c0_90] : memref<3x16x128xf32, #tpu.memory_space<vmem>>, vector<1x16x128xf32>
      %437 = vector.shape_cast %436 : vector<1x16x128xf32> to vector<16x128xf32>
      %438 = vector.shape_cast %434 : vector<16x128xf32> to vector<1x16x128xf32>
      tpu.vector_store %arg8[%c1_89, %435, %c0_90], %438 {strides = array<i32>} : memref<3x16x128xf32, #tpu.memory_space<vmem>>, vector<1x16x128xf32>,
      %439 = vector.broadcast %82 : f32 to vector<16x128xf32>
      %440 = arith.mulf %206, %439 : vector<16x128xf32>
      %441 = vector.broadcast %85 : f32 to vector<16x128xf32>
      %442 = arith.mulf %224, %441 : vector<16x128xf32>
      %443 = arith.addf %440, %442 : vector<16x128xf32>
      %444 = vector.broadcast %88 : f32 to vector<16x128xf32>
      %445 = arith.mulf %242, %444 : vector<16x128xf32>
      %446 = arith.addf %443, %445 : vector<16x128xf32>
      %447 = vector.broadcast %91 : f32 to vector<16x128xf32>
      %448 = arith.mulf %260, %447 : vector<16x128xf32>
      %449 = arith.addf %446, %448 : vector<16x128xf32>
      %450 = vector.broadcast %94 : f32 to vector<16x128xf32>
      %451 = arith.mulf %278, %450 : vector<16x128xf32>
      %452 = arith.addf %449, %451 : vector<16x128xf32>
      %453 = vector.broadcast %97 : f32 to vector<16x128xf32>
      %454 = arith.mulf %296, %453 : vector<16x128xf32>
      %455 = arith.addf %452, %454 : vector<16x128xf32>
      %456 = vector.broadcast %100 : f32 to vector<16x128xf32>
      %457 = arith.mulf %314, %456 : vector<16x128xf32>
      %458 = arith.addf %455, %457 : vector<16x128xf32>
      %459 = vector.broadcast %103 : f32 to vector<16x128xf32>
      %460 = arith.mulf %332, %459 : vector<16x128xf32>
      %461 = arith.addf %458, %460 : vector<16x128xf32>
      %462 = vector.broadcast %106 : f32 to vector<16x128xf32>
      %463 = arith.mulf %350, %462 : vector<16x128xf32>
      %464 = arith.addf %461, %463 : vector<16x128xf32>
      %465 = vector.broadcast %109 : f32 to vector<16x128xf32>
      %466 = arith.mulf %368, %465 : vector<16x128xf32>
      %467 = arith.addf %464, %466 : vector<16x128xf32>
      %468 = vector.broadcast %112 : f32 to vector<16x128xf32>
      %469 = arith.addf %467, %468 : vector<16x128xf32>
      %c2_91 = arith.constant 2 : index
      %470 = arith.index_cast %119 : i32 to index
      %c0_92 = arith.constant 0 : index
      %471 = vector.load %arg8[%c2_91, %470, %c0_92] : memref<3x16x128xf32, #tpu.memory_space<vmem>>, vector<1x16x128xf32>
      %472 = vector.shape_cast %471 : vector<1x16x128xf32> to vector<16x128xf32>
      %473 = vector.shape_cast %469 : vector<16x128xf32> to vector<1x16x128xf32>
      tpu.vector_store %arg8[%c2_91, %470, %c0_92], %473 {strides = array<i32>} : memref<3x16x128xf32, #tpu.memory_space<vmem>>, vector<1x16x128xf32>,
    }
    return
  }
  func.func @transform_0(%arg0: i32) -> (i32, i32, i32) {
    %c0_i32 = arith.constant 0 : i32
    %c0_i32_0 = arith.constant 0 : i32
    %c0_i32_1 = arith.constant 0 : i32
    return %c0_i32, %arg0, %c0_i32_0 : i32, i32, i32
  }
  func.func @transform_1(%arg0: i32) -> i32 {
    %c0_i32 = arith.constant 0 : i32
    %c0_i32_0 = arith.constant 0 : i32
    return %c0_i32 : i32
  }
  func.func @transform_2(%arg0: i32) -> i32 {
    %c0_i32 = arith.constant 0 : i32
    %c0_i32_0 = arith.constant 0 : i32
    return %c0_i32 : i32
  }
  func.func @transform_3(%arg0: i32) -> i32 {
    %c0_i32 = arith.constant 0 : i32
    %c0_i32_0 = arith.constant 0 : i32
    return %c0_i32 : i32
  }
  func.func @transform_4(%arg0: i32) -> i32 {
    %c0_i32 = arith.constant 0 : i32
    %c0_i32_0 = arith.constant 0 : i32
    return %c0_i32 : i32
  }
  func.func @transform_5(%arg0: i32) -> i32 {
    %c0_i32 = arith.constant 0 : i32
    %c0_i32_0 = arith.constant 0 : i32
    return %c0_i32 : i32
  }
  func.func @transform_6(%arg0: i32) -> i32 {
    %c0_i32 = arith.constant 0 : i32
    %c0_i32_0 = arith.constant 0 : i32
    return %c0_i32 : i32
  }
  func.func @transform_7(%arg0: i32) -> (i32, i32, i32) {
    %c0_i32 = arith.constant 0 : i32
    %c0_i32_0 = arith.constant 0 : i32
    %c0_i32_1 = arith.constant 0 : i32
    return %c0_i32, %arg0, %c0_i32_0 : i32, i32, i32
  }
}

</mosaic_0001>

<llo_original>
// kernel: tpu_custom_call.1
$region0: #{tpu_custom_call.1}
  #allocation0 [shape = 'u32[]', space=smem, size = 0x4, offset = 0x4, fixed_abs, tag = 'smem constant byte address 0x4 - core index']
  #allocation1 [shape = 'u32[144,128]{1,0:T(1,128)}', space=vmem, size = 0x12000, scoped, tag = 'internal scratch']
  %s0 = inlined_call_operand.hbm [shape: f32[3,16,128], index: 0, kind: input, shape index: {}]
  %s1 = inlined_call_operand.vmem [shape: f32[15], index: 1, kind: input, shape index: {}]
  %s2 = inlined_call_operand.vmem [shape: f32[5], index: 2, kind: input, shape index: {}]
  %s3 = inlined_call_operand.vmem [shape: f32[50], index: 3, kind: input, shape index: {}]
  %s4 = inlined_call_operand.vmem [shape: f32[10], index: 4, kind: input, shape index: {}]
  %s5 = inlined_call_operand.vmem [shape: f32[30], index: 5, kind: input, shape index: {}]
  %s6 = inlined_call_operand.vmem [shape: f32[3], index: 6, kind: input, shape index: {}]
  %s7 = inlined_call_operand.hbm [shape: f32[3,16,128], index: 7, kind: output, shape index: {}]
  %s8 = sld [smem:[#allocation0]]
  $region73: #{tpu_custom_call.1} parent=0
    _
  %s10 = ssub.s32 1, %s8
  %s11 = scalar_select 0, %s10, %s8
  $region1: #{tpu_custom_call.1} parent=0
    #allocation2 [shape = 'u8[24576]{0}', space=vmem, size = 0x6000, scoped, tag = 'input window, operand 0, single buffered']
    #allocation3 [shape = 's32[1]{0}', space=sflag, size = 0x4, scoped, tag = 'scoped memory for tpu_custom_call.1']
    #allocation4 [shape = 's32[1]{0}', space=sflag, size = 0x4, scoped, tag = 'scoped memory for tpu_custom_call.1']
    #allocation5 [shape = 's32[1]{0}', space=sflag, size = 0x4, scoped, tag = 'scoped memory for tpu_custom_call.1']
    #allocation6 [shape = 'u8[512]{0}', space=smem, size = 0x200, scoped, tag = 'input window, operand 1, single buffered']
    #allocation7 [shape = 'u8[512]{0}', space=smem, size = 0x200, scoped, tag = 'input window, operand 2, single buffered']
    #allocation8 [shape = 's32[1]{0}', space=sflag, size = 0x4, scoped, tag = 'scoped memory for tpu_custom_call.1']
    #allocation9 [shape = 'u8[512]{0}', space=smem, size = 0x200, scoped, tag = 'input window, operand 3, single buffered']
    #allocation10 [shape = 'u8[512]{0}', space=smem, size = 0x200, scoped, tag = 'input window, operand 4, single buffered']
    #allocation11 [shape = 's32[1]{0}', space=sflag, size = 0x4, scoped, tag = 'scoped memory for tpu_custom_call.1']
    #allocation12 [shape = 'u8[512]{0}', space=smem, size = 0x200, scoped, tag = 'input window, operand 5, single buffered']
    #allocation13 [shape = 'u8[512]{0}', space=smem, size = 0x200, scoped, tag = 'input window, operand 6, single buffered']
    #allocation14 [shape = 's32[1]{0}', space=sflag, size = 0x4, scoped, tag = 'scoped memory for tpu_custom_call.1']
    #allocation15 [shape = 'u8[24576]{0}', space=vmem, size = 0x6000, scoped, tag = 'output window, operand 0, single buffered']
    %12 = vsyncpa [#allocation3], 0
    %13 = vsyncpa [#allocation5], 0
    %14 = vsyncpa [#allocation8], 0
    %15 = vsyncpa [#allocation11], 0
    %16 = vsyncpa [#allocation14], 0
    %17 = vsyncpa [#allocation4], 0
    // Predicated region
    $region2: #{tpu_custom_call.1} parent=1 // pred_check
      _
    $region3: #{tpu_custom_call.1} parent=1 // pred_check_branch
      %19 = sbr.rel (0) target = $region5
    $region4: #{tpu_custom_call.1} parent=1 // pred_region
      %s21 = ssub.s32 768, 768
      %22 = vsyncadd [#allocation3], %s21
      %s23 = sshll.u32 [#allocation2], 4
      %s24 = int_to_ptr.vmem [resolvable:$true] %s23
      %29 = dma.hbm_to_vmem [thread:$0]  %s0, 768, %s24, [#allocation3], 128, 128, 8
    $region5: #{tpu_custom_call.1} parent=1 // pred_fallthru
      _
    // Predicated region
    $region6: #{tpu_custom_call.1} parent=1 // pred_check
      _
    $region7: #{tpu_custom_call.1} parent=1 // pred_check_branch
      %31 = sbr.rel (0) target = $region9
    $region8: #{tpu_custom_call.1} parent=1 // pred_region
      %s33 = ssub.s32 16, 16
      %34 = vsyncadd [#allocation5], %s33
      %s36 = sshll.u32 %s1, 4
      %s37 = int_to_ptr.vmem [resolvable:$true] %s36
      %39 = dma.vmem_to_smem %s37, 16, [#allocation6], [#allocation5]
    $region9: #{tpu_custom_call.1} parent=1 // pred_fallthru
      _
    // Predicated region
    $region10: #{tpu_custom_call.1} parent=1 // pred_check
      _
    $region11: #{tpu_custom_call.1} parent=1 // pred_check_branch
      %41 = sbr.rel (0) target = $region13
    $region12: #{tpu_custom_call.1} parent=1 // pred_region
      %s43 = ssub.s32 16, 16
      %44 = vsyncadd [#allocation8], %s43
      %s46 = sshll.u32 %s2, 4
      %s47 = int_to_ptr.vmem [resolvable:$true] %s46
      %49 = dma.vmem_to_smem %s47, 16, [#allocation7], [#allocation8]
    $region13: #{tpu_custom_call.1} parent=1 // pred_fallthru
      _
    // Predicated region
    $region14: #{tpu_custom_call.1} parent=1 // pred_check
      _
    $region15: #{tpu_custom_call.1} parent=1 // pred_check_branch
      %51 = sbr.rel (0) target = $region17
    $region16: #{tpu_custom_call.1} parent=1 // pred_region
      %s53 = ssub.s32 16, 16
      %54 = vsyncadd [#allocation8], %s53
      %s56 = sshll.u32 %s3, 4
      %s57 = int_to_ptr.vmem [resolvable:$true] %s56
      %59 = dma.vmem_to_smem %s57, 16, [#allocation9], [#allocation8]
    $region17: #{tpu_custom_call.1} parent=1 // pred_fallthru
      _
    // Predicated region
    $region18: #{tpu_custom_call.1} parent=1 // pred_check
      _
    $region19: #{tpu_custom_call.1} parent=1 // pred_check_branch
      %61 = sbr.rel (0) target = $region21
    $region20: #{tpu_custom_call.1} parent=1 // pred_region
      %s63 = ssub.s32 16, 16
      %64 = vsyncadd [#allocation11], %s63
      %s66 = sshll.u32 %s4, 4
      %s67 = int_to_ptr.vmem [resolvable:$true] %s66
      %69 = dma.vmem_to_smem %s67, 16, [#allocation10], [#allocation11]
    $region21: #{tpu_custom_call.1} parent=1 // pred_fallthru
      _
    // Predicated region
    $region22: #{tpu_custom_call.1} parent=1 // pred_check
      _
    $region23: #{tpu_custom_call.1} parent=1 // pred_check_branch
      %71 = sbr.rel (0) target = $region25
    $region24: #{tpu_custom_call.1} parent=1 // pred_region
      %s73 = ssub.s32 16, 16
      %74 = vsyncadd [#allocation11], %s73
      %s76 = sshll.u32 %s5, 4
      %s77 = int_to_ptr.vmem [resolvable:$true] %s76
      %79 = dma.vmem_to_smem %s77, 16, [#allocation12], [#allocation11]
    $region25: #{tpu_custom_call.1} parent=1 // pred_fallthru
      _
    // Predicated region
    $region26: #{tpu_custom_call.1} parent=1 // pred_check
      _
    $region27: #{tpu_custom_call.1} parent=1 // pred_check_branch
      %81 = sbr.rel (0) target = $region29
    $region28: #{tpu_custom_call.1} parent=1 // pred_region
      %s83 = ssub.s32 16, 16
      %84 = vsyncadd [#allocation14], %s83
      %s86 = sshll.u32 %s6, 4
      %s87 = int_to_ptr.vmem [resolvable:$true] %s86
      %89 = dma.vmem_to_smem %s87, 16, [#allocation13], [#allocation14]
    $region29: #{tpu_custom_call.1} parent=1 // pred_fallthru
      _
    // Predicated region
    $region30: #{tpu_custom_call.1} parent=1 // pred_check
      _
    $region31: #{tpu_custom_call.1} parent=1 // pred_check_branch
      %91 = sbr.rel (0) target = $region33
    $region32: #{tpu_custom_call.1} parent=1 // pred_region
      %92 = dma.done [#allocation3], 768
    $region33: #{tpu_custom_call.1} parent=1 // pred_fallthru
      _
    // Predicated region
    $region34: #{tpu_custom_call.1} parent=1 // pred_check
      _
    $region35: #{tpu_custom_call.1} parent=1 // pred_check_branch
      %94 = sbr.rel (0) target = $region37
    $region36: #{tpu_custom_call.1} parent=1 // pred_region
      %95 = dma.done [#allocation5], 16
    $region37: #{tpu_custom_call.1} parent=1 // pred_fallthru
      _
    // Predicated region
    $region38: #{tpu_custom_call.1} parent=1 // pred_check
      _
    $region39: #{tpu_custom_call.1} parent=1 // pred_check_branch
      %97 = sbr.rel (0) target = $region41
    $region40: #{tpu_custom_call.1} parent=1 // pred_region
      %98 = dma.done [#allocation8], 16
    $region41: #{tpu_custom_call.1} parent=1 // pred_fallthru
      _
    // Predicated region
    $region42: #{tpu_custom_call.1} parent=1 // pred_check
      _
    $region43: #{tpu_custom_call.1} parent=1 // pred_check_branch
      %100 = sbr.rel (0) target = $region45
    $region44: #{tpu_custom_call.1} parent=1 // pred_region
      %101 = dma.done [#allocation8], 16
    $region45: #{tpu_custom_call.1} parent=1 // pred_fallthru
      _
    // Predicated region
    $region46: #{tpu_custom_call.1} parent=1 // pred_check
      _
    $region47: #{tpu_custom_call.1} parent=1 // pred_check_branch
      %103 = sbr.rel (0) target = $region49
    $region48: #{tpu_custom_call.1} parent=1 // pred_region
      %104 = dma.done [#allocation11], 16
    $region49: #{tpu_custom_call.1} parent=1 // pred_fallthru
      _
    // Predicated region
    $region50: #{tpu_custom_call.1} parent=1 // pred_check
      _
    $region51: #{tpu_custom_call.1} parent=1 // pred_check_branch
      %106 = sbr.rel (0) target = $region53
    $region52: #{tpu_custom_call.1} parent=1 // pred_region
      %107 = dma.done [#allocation11], 16
    $region53: #{tpu_custom_call.1} parent=1 // pred_fallthru
      _
    // Predicated region
    $region54: #{tpu_custom_call.1} parent=1 // pred_check
      _
    $region55: #{tpu_custom_call.1} parent=1 // pred_check_branch
      %109 = sbr.rel (0) target = $region57
    $region56: #{tpu_custom_call.1} parent=1 // pred_region
      %110 = dma.done [#allocation14], 16
    $region57: #{tpu_custom_call.1} parent=1 // pred_fallthru
      _
    %111 = sfence
    %s112 = sld [smem:[#allocation6]]
    %s113 = sld [smem:[#allocation6 + $0x1]]
    %s114 = sld [smem:[#allocation6 + $0x2]]
    %s115 = sld [smem:[#allocation6 + $0x3]]
    %s116 = sld [smem:[#allocation6 + $0x4]]
    %s117 = sld [smem:[#allocation6 + $0x5]]
    %s118 = sld [smem:[#allocation6 + $0x6]]
    %s119 = sld [smem:[#allocation6 + $0x7]]
    %s120 = sld [smem:[#allocation6 + $0x8]]
    %s121 = sld [smem:[#allocation6 + $0x9]]
    %s122 = sld [smem:[#allocation6 + $0xa]]
    %s123 = sld [smem:[#allocation6 + $0xb]]
    %s124 = sld [smem:[#allocation6 + $0xc]]
    %s125 = sld [smem:[#allocation6 + $0xd]]
    %s126 = sld [smem:[#allocation6 + $0xe]]
    %s127 = sld [smem:[#allocation7]]
    %s128 = sld [smem:[#allocation7 + $0x1]]
    %s129 = sld [smem:[#allocation7 + $0x2]]
    %s130 = sld [smem:[#allocation7 + $0x3]]
    %s131 = sld [smem:[#allocation7 + $0x4]]
    %s132 = sld [smem:[#allocation9]]
    %s133 = sld [smem:[#allocation9 + $0x1]]
    %s134 = sld [smem:[#allocation9 + $0x2]]
    %s135 = sld [smem:[#allocation9 + $0x3]]
    %s136 = sld [smem:[#allocation9 + $0x4]]
    %s137 = sld [smem:[#allocation9 + $0x5]]
    %s138 = sld [smem:[#allocation9 + $0x6]]
    %s139 = sld [smem:[#allocation9 + $0x7]]
    %s140 = sld [smem:[#allocation9 + $0x8]]
    %s141 = sld [smem:[#allocation9 + $0x9]]
    %s142 = sld [smem:[#allocation9 + $0xa]]
    %s143 = sld [smem:[#allocation9 + $0xb]]
    %s144 = sld [smem:[#allocation9 + $0xc]]
    %s145 = sld [smem:[#allocation9 + $0xd]]
    %s146 = sld [smem:[#allocation9 + $0xe]]
    %s147 = sld [smem:[#allocation9 + $0xf]]
    %s148 = sld [smem:[#allocation9 + $0x10]]
    %s149 = sld [smem:[#allocation9 + $0x11]]
    %s150 = sld [smem:[#allocation9 + $0x12]]
    %s151 = sld [smem:[#allocation9 + $0x13]]
    %s152 = sld [smem:[#allocation9 + $0x14]]
    %s153 = sld [smem:[#allocation9 + $0x15]]
    %s154 = sld [smem:[#allocation9 + $0x16]]
    %s155 = sld [smem:[#allocation9 + $0x17]]
    %s156 = sld [smem:[#allocation9 + $0x18]]
    %s157 = sld [smem:[#allocation9 + $0x19]]
    %s158 = sld [smem:[#allocation9 + $0x1a]]
    %s159 = sld [smem:[#allocation9 + $0x1b]]
    %s160 = sld [smem:[#allocation9 + $0x1c]]
    %s161 = sld [smem:[#allocation9 + $0x1d]]
    %s162 = sld [smem:[#allocation9 + $0x1e]]
    %s163 = sld [smem:[#allocation9 + $0x1f]]
    %s164 = sld [smem:[#allocation9 + $0x20]]
    %s165 = sld [smem:[#allocation9 + $0x21]]
    %s166 = sld [smem:[#allocation9 + $0x22]]
    %s167 = sld [smem:[#allocation9 + $0x23]]
    %s168 = sld [smem:[#allocation9 + $0x24]]
    %s169 = sld [smem:[#allocation9 + $0x25]]
    %s170 = sld [smem:[#allocation9 + $0x26]]
    %s171 = sld [smem:[#allocation9 + $0x27]]
    %s172 = sld [smem:[#allocation9 + $0x28]]
    %s173 = sld [smem:[#allocation9 + $0x29]]
    %s174 = sld [smem:[#allocation9 + $0x2a]]
    %s175 = sld [smem:[#allocation9 + $0x2b]]
    %s176 = sld [smem:[#allocation9 + $0x2c]]
    %s177 = sld [smem:[#allocation9 + $0x2d]]
    %s178 = sld [smem:[#allocation9 + $0x2e]]
    %s179 = sld [smem:[#allocation9 + $0x2f]]
    %s180 = sld [smem:[#allocation9 + $0x30]]
    %s181 = sld [smem:[#allocation9 + $0x31]]
    %s182 = sld [smem:[#allocation10]]
    %s183 = sld [smem:[#allocation10 + $0x1]]
    %s184 = sld [smem:[#allocation10 + $0x2]]
    %s185 = sld [smem:[#allocation10 + $0x3]]
    %s186 = sld [smem:[#allocation10 + $0x4]]
    %s187 = sld [smem:[#allocation10 + $0x5]]
    %s188 = sld [smem:[#allocation10 + $0x6]]
    %s189 = sld [smem:[#allocation10 + $0x7]]
    %s190 = sld [smem:[#allocation10 + $0x8]]
    %s191 = sld [smem:[#allocation10 + $0x9]]
    %s192 = sld [smem:[#allocation12]]
    %s193 = sld [smem:[#allocation12 + $0x1]]
    %s194 = sld [smem:[#allocation12 + $0x2]]
    %s195 = sld [smem:[#allocation12 + $0x3]]
    %s196 = sld [smem:[#allocation12 + $0x4]]
    %s197 = sld [smem:[#allocation12 + $0x5]]
    %s198 = sld [smem:[#allocation12 + $0x6]]
    %s199 = sld [smem:[#allocation12 + $0x7]]
    %s200 = sld [smem:[#allocation12 + $0x8]]
    %s201 = sld [smem:[#allocation12 + $0x9]]
    %s202 = sld [smem:[#allocation12 + $0xa]]
    %s203 = sld [smem:[#allocation12 + $0xb]]
    %s204 = sld [smem:[#allocation12 + $0xc]]
    %s205 = sld [smem:[#allocation12 + $0xd]]
    %s206 = sld [smem:[#allocation12 + $0xe]]
    %s207 = sld [smem:[#allocation12 + $0xf]]
    %s208 = sld [smem:[#allocation12 + $0x10]]
    %s209 = sld [smem:[#allocation12 + $0x11]]
    %s210 = sld [smem:[#allocation12 + $0x12]]
    %s211 = sld [smem:[#allocation12 + $0x13]]
    %s212 = sld [smem:[#allocation12 + $0x14]]
    %s213 = sld [smem:[#allocation12 + $0x15]]
    %s214 = sld [smem:[#allocation12 + $0x16]]
    %s215 = sld [smem:[#allocation12 + $0x17]]
    %s216 = sld [smem:[#allocation12 + $0x18]]
    %s217 = sld [smem:[#allocation12 + $0x19]]
    %s218 = sld [smem:[#allocation12 + $0x1a]]
    %s219 = sld [smem:[#allocation12 + $0x1b]]
    %s220 = sld [smem:[#allocation12 + $0x1c]]
    %s221 = sld [smem:[#allocation12 + $0x1d]]
    %s222 = sld [smem:[#allocation13]]
    %s223 = sld [smem:[#allocation13 + $0x1]]
    %s224 = sld [smem:[#allocation13 + $0x2]]
    %s225 = ssub.s32 1, 0
    %p226 = scmp.lt.s32.totalorder %s225, 1
    %s227 = scalar_select %p226, %s225, 1
    // While loop
    $region58: #{tpu_custom_call.1} parent=1 // loop_pre_header
      _
    $region59: #{tpu_custom_call.1} parent=1 // loop_header
      %s229 = sphi 0, %s231
      %p230 = scmp.ge.s32.totalorder %s229, %s227
    $region60: #{tpu_custom_call.1} parent=1 // loop_header_branch
      %233 = sbr.rel (%p230) target = $region64
    $region61: #{tpu_custom_call.1} parent=1 // loop_body
      %s234 = smul.u32 %s229, 16
      %s235 = scalar_lea.vmem [#allocation2], %s234
      %v236 = vld [vmem:[%s235] sm:$0xff]
      %v237 = vld [vmem:[%s235 + $0x8] sm:$0xff]
      %s238 = sadd.s32 %s234, 16
      %s239 = scalar_lea.vmem [#allocation2], %s238
      %v240 = vld [vmem:[%s239] sm:$0xff]
      %v241 = vld [vmem:[%s239 + $0x8] sm:$0xff]
      %s242 = sadd.s32 %s234, 32
      %s243 = scalar_lea.vmem [#allocation2], %s242
      %v244 = vld [vmem:[%s243] sm:$0xff]
      %v245 = vld [vmem:[%s243 + $0x8] sm:$0xff]
      %v246 = vstv %s112
      %v247 = vmul.f32 %v236, %v246
      %v248 = vmul.f32 %v237, %v246
      %v249 = vstv %s117
      %v250 = vmul.f32 %v240, %v249
      %v251 = vmul.f32 %v241, %v249
      %v252 = vadd.f32 %v247, %v250
      %v253 = vadd.f32 %v248, %v251
      %v254 = vstv %s122
      %v255 = vmul.f32 %v244, %v254
      %v256 = vmul.f32 %v245, %v254
      %v257 = vadd.f32 %v252, %v255
      %v258 = vadd.f32 %v253, %v256
      %v259 = vstv %s127
      %v260 = vadd.f32 %v257, %v259
      %v261 = vadd.f32 %v258, %v259
      %v262 = vmax.f32 %v260, 0.0
      %v263 = vmax.f32 %v261, 0.0
      %v264 = vstv %s113
      %v265 = vmul.f32 %v236, %v264
      %v266 = vmul.f32 %v237, %v264
      %v267 = vstv %s118
      %v268 = vmul.f32 %v240, %v267
      %v269 = vmul.f32 %v241, %v267
      %v270 = vadd.f32 %v265, %v268
      %v271 = vadd.f32 %v266, %v269
      %v272 = vstv %s123
      %v273 = vmul.f32 %v244, %v272
      %v274 = vmul.f32 %v245, %v272
      %v275 = vadd.f32 %v270, %v273
      %v276 = vadd.f32 %v271, %v274
      %v277 = vstv %s128
      %v278 = vadd.f32 %v275, %v277
      %v279 = vadd.f32 %v276, %v277
      %v280 = vmax.f32 %v278, 0.0
      %v281 = vmax.f32 %v279, 0.0
      %v282 = vstv %s114
      %v283 = vmul.f32 %v236, %v282
      %v284 = vmul.f32 %v237, %v282
      %v285 = vstv %s119
      %v286 = vmul.f32 %v240, %v285
      %v287 = vmul.f32 %v241, %v285
      %v288 = vadd.f32 %v283, %v286
      %v289 = vadd.f32 %v284, %v287
      %v290 = vstv %s124
      %v291 = vmul.f32 %v244, %v290
      %v292 = vmul.f32 %v245, %v290
      %v293 = vadd.f32 %v288, %v291
      %v294 = vadd.f32 %v289, %v292
      %v295 = vstv %s129
      %v296 = vadd.f32 %v293, %v295
      %v297 = vadd.f32 %v294, %v295
      %v298 = vmax.f32 %v296, 0.0
      %v299 = vmax.f32 %v297, 0.0
      %v300 = vstv %s115
      %v301 = vmul.f32 %v236, %v300
      %v302 = vmul.f32 %v237, %v300
      %v303 = vstv %s120
      %v304 = vmul.f32 %v240, %v303
      %v305 = vmul.f32 %v241, %v303
      %v306 = vadd.f32 %v301, %v304
      %v307 = vadd.f32 %v302, %v305
      %v308 = vstv %s125
      %v309 = vmul.f32 %v244, %v308
      %v310 = vmul.f32 %v245, %v308
      %v311 = vadd.f32 %v306, %v309
      %v312 = vadd.f32 %v307, %v310
      %v313 = vstv %s130
      %v314 = vadd.f32 %v311, %v313
      %v315 = vadd.f32 %v312, %v313
      %v316 = vmax.f32 %v314, 0.0
      %v317 = vmax.f32 %v315, 0.0
      %v318 = vstv %s116
      %v319 = vmul.f32 %v236, %v318
      %v320 = vmul.f32 %v237, %v318
      %v321 = vstv %s121
      %v322 = vmul.f32 %v240, %v321
      %v323 = vmul.f32 %v241, %v321
      %v324 = vadd.f32 %v319, %v322
      %v325 = vadd.f32 %v320, %v323
      %v326 = vstv %s126
      %v327 = vmul.f32 %v244, %v326
      %v328 = vmul.f32 %v245, %v326
      %v329 = vadd.f32 %v324, %v327
      %v330 = vadd.f32 %v325, %v328
      %v331 = vstv %s131
      %v332 = vadd.f32 %v329, %v331
      %v333 = vadd.f32 %v330, %v331
      %v334 = vmax.f32 %v332, 0.0
      %v335 = vmax.f32 %v333, 0.0
      %v336 = vstv %s132
      %v337 = vmul.f32 %v262, %v336
      %v338 = vmul.f32 %v263, %v336
      %v339 = vstv %s142
      %v340 = vmul.f32 %v280, %v339
      %v341 = vmul.f32 %v281, %v339
      %v342 = vadd.f32 %v337, %v340
      %v343 = vadd.f32 %v338, %v341
      %v344 = vstv %s152
      %v345 = vmul.f32 %v298, %v344
      %v346 = vmul.f32 %v299, %v344
      %v347 = vadd.f32 %v342, %v345
      %v348 = vadd.f32 %v343, %v346
      %v349 = vstv %s162
      %v350 = vmul.f32 %v316, %v349
      %v351 = vmul.f32 %v317, %v349
      %v352 = vadd.f32 %v347, %v350
      %v353 = vadd.f32 %v348, %v351
      %v354 = vstv %s172
      %v355 = vmul.f32 %v334, %v354
      %v356 = vmul.f32 %v335, %v354
      %v357 = vadd.f32 %v352, %v355
      %v358 = vadd.f32 %v353, %v356
      %v359 = vstv %s182
      %v360 = vadd.f32 %v357, %v359
      %v361 = vadd.f32 %v358, %v359
      %v362 = vmax.f32 %v360, 0.0
      %v363 = vmax.f32 %v361, 0.0
      %v364 = vstv %s133
      %v365 = vmul.f32 %v262, %v364
      %v366 = vmul.f32 %v263, %v364
      %v367 = vstv %s143
      %v368 = vmul.f32 %v280, %v367
      %v369 = vmul.f32 %v281, %v367
      %v370 = vadd.f32 %v365, %v368
      %v371 = vadd.f32 %v366, %v369
      %v372 = vstv %s153
      %v373 = vmul.f32 %v298, %v372
      %v374 = vmul.f32 %v299, %v372
      %v375 = vadd.f32 %v370, %v373
      %v376 = vadd.f32 %v371, %v374
      %v377 = vstv %s163
      %v378 = vmul.f32 %v316, %v377
      %v379 = vmul.f32 %v317, %v377
      %v380 = vadd.f32 %v375, %v378
      %v381 = vadd.f32 %v376, %v379
      %v382 = vstv %s173
      %v383 = vmul.f32 %v334, %v382
      %v384 = vmul.f32 %v335, %v382
      %v385 = vadd.f32 %v380, %v383
      %v386 = vadd.f32 %v381, %v384
      %v387 = vstv %s183
      %v388 = vadd.f32 %v385, %v387
      %v389 = vadd.f32 %v386, %v387
      %v390 = vmax.f32 %v388, 0.0
      %v391 = vmax.f32 %v389, 0.0
      %v392 = vstv %s134
      %v393 = vmul.f32 %v262, %v392
      %v394 = vmul.f32 %v263, %v392
      %v395 = vstv %s144
      %v396 = vmul.f32 %v280, %v395
      %v397 = vmul.f32 %v281, %v395
      %v398 = vadd.f32 %v393, %v396
      %v399 = vadd.f32 %v394, %v397
      %v400 = vstv %s154
      %v401 = vmul.f32 %v298, %v400
      %v402 = vmul.f32 %v299, %v400
      %v403 = vadd.f32 %v398, %v401
      %v404 = vadd.f32 %v399, %v402
      %v405 = vstv %s164
      %v406 = vmul.f32 %v316, %v405
      %v407 = vmul.f32 %v317, %v405
      %v408 = vadd.f32 %v403, %v406
      %v409 = vadd.f32 %v404, %v407
      %v410 = vstv %s174
      %v411 = vmul.f32 %v334, %v410
      %v412 = vmul.f32 %v335, %v410
      %v413 = vadd.f32 %v408, %v411
      %v414 = vadd.f32 %v409, %v412
      %v415 = vstv %s184
      %v416 = vadd.f32 %v413, %v415
      %v417 = vadd.f32 %v414, %v415
      %v418 = vmax.f32 %v416, 0.0
      %v419 = vmax.f32 %v417, 0.0
      %v420 = vstv %s135
      %v421 = vmul.f32 %v262, %v420
      %v422 = vmul.f32 %v263, %v420
      %v423 = vstv %s145
      %v424 = vmul.f32 %v280, %v423
      %v425 = vmul.f32 %v281, %v423
      %v426 = vadd.f32 %v421, %v424
      %v427 = vadd.f32 %v422, %v425
      %v428 = vstv %s155
      %v429 = vmul.f32 %v298, %v428
      %v430 = vmul.f32 %v299, %v428
      %v431 = vadd.f32 %v426, %v429
      %v432 = vadd.f32 %v427, %v430
      %v433 = vstv %s165
      %v434 = vmul.f32 %v316, %v433
      %v435 = vmul.f32 %v317, %v433
      %v436 = vadd.f32 %v431, %v434
      %v437 = vadd.f32 %v432, %v435
      %v438 = vstv %s175
      %v439 = vmul.f32 %v334, %v438
      %v440 = vmul.f32 %v335, %v438
      %v441 = vadd.f32 %v436, %v439
      %v442 = vadd.f32 %v437, %v440
      %v443 = vstv %s185
      %v444 = vadd.f32 %v441, %v443
      %v445 = vadd.f32 %v442, %v443
      %v446 = vmax.f32 %v444, 0.0
      %v447 = vmax.f32 %v445, 0.0
      %v448 = vstv %s136
      %v449 = vmul.f32 %v262, %v448
      %v450 = vmul.f32 %v263, %v448
      %v451 = vstv %s146
      %v452 = vmul.f32 %v280, %v451
      %v453 = vmul.f32 %v281, %v451
      %v454 = vadd.f32 %v449, %v452
      %v455 = vadd.f32 %v450, %v453
      %v456 = vstv %s156
      %v457 = vmul.f32 %v298, %v456
      %v458 = vmul.f32 %v299, %v456
      %v459 = vadd.f32 %v454, %v457
      %v460 = vadd.f32 %v455, %v458
      %v461 = vstv %s166
      %v462 = vmul.f32 %v316, %v461
      %v463 = vmul.f32 %v317, %v461
      %v464 = vadd.f32 %v459, %v462
      %v465 = vadd.f32 %v460, %v463
      %v466 = vstv %s176
      %v467 = vmul.f32 %v334, %v466
      %v468 = vmul.f32 %v335, %v466
      %v469 = vadd.f32 %v464, %v467
      %v470 = vadd.f32 %v465, %v468
      %v471 = vstv %s186
      %v472 = vadd.f32 %v469, %v471
      %v473 = vadd.f32 %v470, %v471
      %v474 = vmax.f32 %v472, 0.0
      %v475 = vmax.f32 %v473, 0.0
      %v476 = vstv %s137
      %v477 = vmul.f32 %v262, %v476
      %v478 = vmul.f32 %v263, %v476
      %v479 = vstv %s147
      %v480 = vmul.f32 %v280, %v479
      %v481 = vmul.f32 %v281, %v479
      %v482 = vadd.f32 %v477, %v480
      %v483 = vadd.f32 %v478, %v481
      %v484 = vstv %s157
      %v485 = vmul.f32 %v298, %v484
      %v486 = vmul.f32 %v299, %v484
      %v487 = vadd.f32 %v482, %v485
      %v488 = vadd.f32 %v483, %v486
      %v489 = vstv %s167
      %v490 = vmul.f32 %v316, %v489
      %v491 = vmul.f32 %v317, %v489
      %v492 = vadd.f32 %v487, %v490
      %v493 = vadd.f32 %v488, %v491
      %v494 = vstv %s177
      %v495 = vmul.f32 %v334, %v494
      %v496 = vmul.f32 %v335, %v494
      %v497 = vadd.f32 %v492, %v495
      %v498 = vadd.f32 %v493, %v496
      %v499 = vstv %s187
      %v500 = vadd.f32 %v497, %v499
      %v501 = vadd.f32 %v498, %v499
      %v502 = vmax.f32 %v500, 0.0
      %v503 = vmax.f32 %v501, 0.0
      %v504 = vstv %s138
      %v505 = vmul.f32 %v262, %v504
      %v506 = vmul.f32 %v263, %v504
      %v507 = vstv %s148
      %v508 = vmul.f32 %v280, %v507
      %v509 = vmul.f32 %v281, %v507
      %v510 = vadd.f32 %v505, %v508
      %v511 = vadd.f32 %v506, %v509
      %v512 = vstv %s158
      %v513 = vmul.f32 %v298, %v512
      %v514 = vmul.f32 %v299, %v512
      %v515 = vadd.f32 %v510, %v513
      %v516 = vadd.f32 %v511, %v514
      %v517 = vstv %s168
      %v518 = vmul.f32 %v316, %v517
      %v519 = vmul.f32 %v317, %v517
      %v520 = vadd.f32 %v515, %v518
      %v521 = vadd.f32 %v516, %v519
      %v522 = vstv %s178
      %v523 = vmul.f32 %v334, %v522
      %v524 = vmul.f32 %v335, %v522
      %v525 = vadd.f32 %v520, %v523
      %v526 = vadd.f32 %v521, %v524
      %v527 = vstv %s188
      %v528 = vadd.f32 %v525, %v527
      %v529 = vadd.f32 %v526, %v527
      %v530 = vmax.f32 %v528, 0.0
      %v531 = vmax.f32 %v529, 0.0
      %v532 = vstv %s139
      %v533 = vmul.f32 %v262, %v532
      %v534 = vmul.f32 %v263, %v532
      %v535 = vstv %s149
      %v536 = vmul.f32 %v280, %v535
      %v537 = vmul.f32 %v281, %v535
      %v538 = vadd.f32 %v533, %v536
      %v539 = vadd.f32 %v534, %v537
      %v540 = vstv %s159
      %v541 = vmul.f32 %v298, %v540
      %v542 = vmul.f32 %v299, %v540
      %v543 = vadd.f32 %v538, %v541
      %v544 = vadd.f32 %v539, %v542
      %v545 = vstv %s169
      %v546 = vmul.f32 %v316, %v545
      %v547 = vmul.f32 %v317, %v545
      %v548 = vadd.f32 %v543, %v546
      %v549 = vadd.f32 %v544, %v547
      %v550 = vstv %s179
      %v551 = vmul.f32 %v334, %v550
      %v552 = vmul.f32 %v335, %v550
      %v553 = vadd.f32 %v548, %v551
      %v554 = vadd.f32 %v549, %v552
      %v555 = vstv %s189
      %v556 = vadd.f32 %v553, %v555
      %v557 = vadd.f32 %v554, %v555
      %v558 = vmax.f32 %v556, 0.0
      %v559 = vmax.f32 %v557, 0.0
      %v560 = vstv %s140
      %v561 = vmul.f32 %v262, %v560
      %v562 = vmul.f32 %v263, %v560
      %v563 = vstv %s150
      %v564 = vmul.f32 %v280, %v563
      %v565 = vmul.f32 %v281, %v563
      %v566 = vadd.f32 %v561, %v564
      %v567 = vadd.f32 %v562, %v565
      %v568 = vstv %s160
      %v569 = vmul.f32 %v298, %v568
      %v570 = vmul.f32 %v299, %v568
      %v571 = vadd.f32 %v566, %v569
      %v572 = vadd.f32 %v567, %v570
      %v573 = vstv %s170
      %v574 = vmul.f32 %v316, %v573
      %v575 = vmul.f32 %v317, %v573
      %v576 = vadd.f32 %v571, %v574
      %v577 = vadd.f32 %v572, %v575
      %v578 = vstv %s180
      %v579 = vmul.f32 %v334, %v578
      %v580 = vmul.f32 %v335, %v578
      %v581 = vadd.f32 %v576, %v579
      %v582 = vadd.f32 %v577, %v580
      %v583 = vstv %s190
      %v584 = vadd.f32 %v581, %v583
      %v585 = vadd.f32 %v582, %v583
      %v586 = vmax.f32 %v584, 0.0
      %v587 = vmax.f32 %v585, 0.0
      %v588 = vstv %s141
      %v589 = vmul.f32 %v262, %v588
      %v590 = vmul.f32 %v263, %v588
      %v591 = vstv %s151
      %v592 = vmul.f32 %v280, %v591
      %v593 = vmul.f32 %v281, %v591
      %v594 = vadd.f32 %v589, %v592
      %v595 = vadd.f32 %v590, %v593
      %v596 = vstv %s161
      %v597 = vmul.f32 %v298, %v596
      %v598 = vmul.f32 %v299, %v596
      %v599 = vadd.f32 %v594, %v597
      %v600 = vadd.f32 %v595, %v598
      %v601 = vstv %s171
      %v602 = vmul.f32 %v316, %v601
      %v603 = vmul.f32 %v317, %v601
      %v604 = vadd.f32 %v599, %v602
      %v605 = vadd.f32 %v600, %v603
      %v606 = vstv %s181
      %v607 = vmul.f32 %v334, %v606
      %v608 = vmul.f32 %v335, %v606
      %v609 = vadd.f32 %v604, %v607
      %v610 = vadd.f32 %v605, %v608
      %v611 = vstv %s191
      %v612 = vadd.f32 %v609, %v611
      %v613 = vadd.f32 %v610, %v611
      %v614 = vmax.f32 %v612, 0.0
      %v615 = vmax.f32 %v613, 0.0
      %v616 = vstv %s192
      %v617 = vmul.f32 %v362, %v616
      %v618 = vmul.f32 %v363, %v616
      %v619 = vstv %s195
      %v620 = vmul.f32 %v390, %v619
      %v621 = vmul.f32 %v391, %v619
      %v622 = vadd.f32 %v617, %v620
      %v623 = vadd.f32 %v618, %v621
      %v624 = vstv %s198
      %v625 = vmul.f32 %v418, %v624
      %v626 = vmul.f32 %v419, %v624
      %v627 = vadd.f32 %v622, %v625
      %v628 = vadd.f32 %v623, %v626
      %v629 = vstv %s201
      %v630 = vmul.f32 %v446, %v629
      %v631 = vmul.f32 %v447, %v629
      %v632 = vadd.f32 %v627, %v630
      %v633 = vadd.f32 %v628, %v631
      %v634 = vstv %s204
      %v635 = vmul.f32 %v474, %v634
      %v636 = vmul.f32 %v475, %v634
      %v637 = vadd.f32 %v632, %v635
      %v638 = vadd.f32 %v633, %v636
      %v639 = vstv %s207
      %v640 = vmul.f32 %v502, %v639
      %v641 = vmul.f32 %v503, %v639
      %v642 = vadd.f32 %v637, %v640
      %v643 = vadd.f32 %v638, %v641
      %v644 = vstv %s210
      %v645 = vmul.f32 %v530, %v644
      %v646 = vmul.f32 %v531, %v644
      %v647 = vadd.f32 %v642, %v645
      %v648 = vadd.f32 %v643, %v646
      %v649 = vstv %s213
      %v650 = vmul.f32 %v558, %v649
      %v651 = vmul.f32 %v559, %v649
      %v652 = vadd.f32 %v647, %v650
      %v653 = vadd.f32 %v648, %v651
      %v654 = vstv %s216
      %v655 = vmul.f32 %v586, %v654
      %v656 = vmul.f32 %v587, %v654
      %v657 = vadd.f32 %v652, %v655
      %v658 = vadd.f32 %v653, %v656
      %v659 = vstv %s219
      %v660 = vmul.f32 %v614, %v659
      %v661 = vmul.f32 %v615, %v659
      %v662 = vadd.f32 %v657, %v660
      %v663 = vadd.f32 %v658, %v661
      %v664 = vstv %s222
      %v665 = vadd.f32 %v662, %v664
      %v666 = vadd.f32 %v663, %v664
      %s667 = scalar_lea.vmem [#allocation15], %s234
      %668 = vst [vmem:[%s667] sm:$0xff] %v665
      %669 = vst [vmem:[%s667 + $0x8] sm:$0xff] %v666
      %v670 = vstv %s193
      %v671 = vmul.f32 %v362, %v670
      %v672 = vmul.f32 %v363, %v670
      %v673 = vstv %s196
      %v674 = vmul.f32 %v390, %v673
      %v675 = vmul.f32 %v391, %v673
      %v676 = vadd.f32 %v671, %v674
      %v677 = vadd.f32 %v672, %v675
      %v678 = vstv %s199
      %v679 = vmul.f32 %v418, %v678
      %v680 = vmul.f32 %v419, %v678
      %v681 = vadd.f32 %v676, %v679
      %v682 = vadd.f32 %v677, %v680
      %v683 = vstv %s202
      %v684 = vmul.f32 %v446, %v683
      %v685 = vmul.f32 %v447, %v683
      %v686 = vadd.f32 %v681, %v684
      %v687 = vadd.f32 %v682, %v685
      %v688 = vstv %s205
      %v689 = vmul.f32 %v474, %v688
      %v690 = vmul.f32 %v475, %v688
      %v691 = vadd.f32 %v686, %v689
      %v692 = vadd.f32 %v687, %v690
      %v693 = vstv %s208
      %v694 = vmul.f32 %v502, %v693
      %v695 = vmul.f32 %v503, %v693
      %v696 = vadd.f32 %v691, %v694
      %v697 = vadd.f32 %v692, %v695
      %v698 = vstv %s211
      %v699 = vmul.f32 %v530, %v698
      %v700 = vmul.f32 %v531, %v698
      %v701 = vadd.f32 %v696, %v699
      %v702 = vadd.f32 %v697, %v700
      %v703 = vstv %s214
      %v704 = vmul.f32 %v558, %v703
      %v705 = vmul.f32 %v559, %v703
      %v706 = vadd.f32 %v701, %v704
      %v707 = vadd.f32 %v702, %v705
      %v708 = vstv %s217
      %v709 = vmul.f32 %v586, %v708
      %v710 = vmul.f32 %v587, %v708
      %v711 = vadd.f32 %v706, %v709
      %v712 = vadd.f32 %v707, %v710
      %v713 = vstv %s220
      %v714 = vmul.f32 %v614, %v713
      %v715 = vmul.f32 %v615, %v713
      %v716 = vadd.f32 %v711, %v714
      %v717 = vadd.f32 %v712, %v715
      %v718 = vstv %s223
      %v719 = vadd.f32 %v716, %v718
      %v720 = vadd.f32 %v717, %v718
      %s721 = scalar_lea.vmem [#allocation15], %s238
      %722 = vst [vmem:[%s721] sm:$0xff] %v719
      %723 = vst [vmem:[%s721 + $0x8] sm:$0xff] %v720
      %v724 = vstv %s194
      %v725 = vmul.f32 %v362, %v724
      %v726 = vmul.f32 %v363, %v724
      %v727 = vstv %s197
      %v728 = vmul.f32 %v390, %v727
      %v729 = vmul.f32 %v391, %v727
      %v730 = vadd.f32 %v725, %v728
      %v731 = vadd.f32 %v726, %v729
      %v732 = vstv %s200
      %v733 = vmul.f32 %v418, %v732
      %v734 = vmul.f32 %v419, %v732
      %v735 = vadd.f32 %v730, %v733
      %v736 = vadd.f32 %v731, %v734
      %v737 = vstv %s203
      %v738 = vmul.f32 %v446, %v737
      %v739 = vmul.f32 %v447, %v737
      %v740 = vadd.f32 %v735, %v738
      %v741 = vadd.f32 %v736, %v739
      %v742 = vstv %s206
      %v743 = vmul.f32 %v474, %v742
      %v744 = vmul.f32 %v475, %v742
      %v745 = vadd.f32 %v740, %v743
      %v746 = vadd.f32 %v741, %v744
      %v747 = vstv %s209
      %v748 = vmul.f32 %v502, %v747
      %v749 = vmul.f32 %v503, %v747
      %v750 = vadd.f32 %v745, %v748
      %v751 = vadd.f32 %v746, %v749
      %v752 = vstv %s212
      %v753 = vmul.f32 %v530, %v752
      %v754 = vmul.f32 %v531, %v752
      %v755 = vadd.f32 %v750, %v753
      %v756 = vadd.f32 %v751, %v754
      %v757 = vstv %s215
      %v758 = vmul.f32 %v558, %v757
      %v759 = vmul.f32 %v559, %v757
      %v760 = vadd.f32 %v755, %v758
      %v761 = vadd.f32 %v756, %v759
      %v762 = vstv %s218
      %v763 = vmul.f32 %v586, %v762
      %v764 = vmul.f32 %v587, %v762
      %v765 = vadd.f32 %v760, %v763
      %v766 = vadd.f32 %v761, %v764
      %v767 = vstv %s221
      %v768 = vmul.f32 %v614, %v767
      %v769 = vmul.f32 %v615, %v767
      %v770 = vadd.f32 %v765, %v768
      %v771 = vadd.f32 %v766, %v769
      %v772 = vstv %s224
      %v773 = vadd.f32 %v770, %v772
      %v774 = vadd.f32 %v771, %v772
      %s775 = scalar_lea.vmem [#allocation15], %s242
      %776 = vst [vmem:[%s775] sm:$0xff] %v773
      %777 = vst [vmem:[%s775 + $0x8] sm:$0xff] %v774
    $region62: #{tpu_custom_call.1} parent=1 // loop_footer
      %s231 = sadd.s32 %s229, 1
    $region63: #{tpu_custom_call.1} parent=1 // loop_footer_branch
      %228 = sbr.rel target = $region59
    $region64: #{tpu_custom_call.1} parent=1 // loop_exit
      _
    // Predicated region
    $region65: #{tpu_custom_call.1} parent=1 // pred_check
      _
    $region66: #{tpu_custom_call.1} parent=1 // pred_check_branch
      %779 = sbr.rel (0) target = $region68
    $region67: #{tpu_custom_call.1} parent=1 // pred_region
      %s781 = ssub.s32 768, 768
      %782 = vsyncadd [#allocation4], %s781
      %s783 = sshll.u32 [#allocation15], 4
      %s784 = int_to_ptr.vmem [resolvable:$true] %s783
      %789 = dma.vmem_to_hbm [thread:$0]  %s784, 768, %s7, [#allocation4], 128, 128, 8
    $region68: #{tpu_custom_call.1} parent=1 // pred_fallthru
      _
    // Predicated region
    $region69: #{tpu_custom_call.1} parent=1 // pred_check
      _
    $region70: #{tpu_custom_call.1} parent=1 // pred_check_branch
      %791 = sbr.rel (0) target = $region72
    $region71: #{tpu_custom_call.1} parent=1 // pred_region
      %792 = dma.done [#allocation4], 768
    $region72: #{tpu_custom_call.1} parent=1 // pred_fallthru
      _
    %793 = vsyncpa [#allocation3], 1
    %794 = vsyncpa [#allocation4], 1
    %795 = vsyncpa [#allocation5], 1
    %796 = vsyncpa [#allocation8], 1
    %797 = vsyncpa [#allocation11], 1
    %798 = vsyncpa [#allocation14], 1

</llo_original>
